<compile_context>
chip_gen: v5e
topology: v5e:2x2
jax: 0.10.0
libtpu: 0.0.40
codegen_flags: <defaults>
</compile_context>

<pallas_src>
import functools

import jax
import jax.numpy as jnp
from jax.experimental import pallas as pl
from jax.experimental.pallas import tpu as pltpu


def _round_up(x, m):
    return (x + m - 1) // m * m


def _textcnn_kernel(seq_len, max_fs, out_dim,
                    ids_ref, wconv_ref, bconv_ref, mask_ref, wfc_ref, bfc_ref,
                    out_ref):
    # ids_ref : [max_fs, TB, S]   int32  ids_ref[k, b, t] = token id at position t+k
    # wconv   : [max_fs, Vp, NFP] bf16   tap-k rows = emb_table @ conv_w_k (zero padded)
    # bconv   : [1, NFP] f32      mask : [S, NFP] f32
    # wfc     : [NFP, OP] f32     bfc  : [1, OP] f32
    # out     : [TB, out_dim] f32
    vp = wconv_ref.shape[1]
    iota_v = jax.lax.broadcasted_iota(jnp.int32, (1, 1, vp), 2)

    def tap(k):
        ids_k = ids_ref[k]                                            # [TB, S] int32
        # Fused gather + conv tap: one-hot (exact in bf16) against the folded weight,
        # a full-depth K=Vp(=128), N=NFP(=128) MXU matmul with f32 accumulation.
        onehot = (ids_k[:, :, None] == iota_v).astype(jnp.bfloat16)   # [TB, S, Vp]
        return jnp.einsum("btv,vf->btf", onehot, wconv_ref[k],
                          preferred_element_type=jnp.float32)

    acc = bconv_ref[...][None, :, :] + tap(0)
    for k in range(1, max_fs):
        acc = acc + tap(k)

    # ReLU, then zero invalid time steps per filter size (ReLU output >= 0, so 0 is a
    # safe neutral element for the max-over-time).
    conved = jnp.maximum(acc, 0.0) * mask_ref[...][None, :, :]
    pooled = jnp.max(conved, axis=1)                                  # [TB, NFP] f32

    # Fused concat + FC: padded channels hit zero rows/cols of wfc -> numerically free.
    fc = jnp.dot(pooled, wfc_ref[...],
                 preferred_element_type=jnp.float32) + bfc_ref[...]
    out_ref[...] = fc[:, :out_dim]                                    # narrow store


def textcnn_forward(emb_table, text, conv_ws, conv_bs, wfc, bfc, *,
                    filter_sizes, n_filters, block_b=512):
    """Full TextCNN forward (eval mode) as one Pallas kernel.

    emb_table : [V, E] f32             text : [B, S] int32
    conv_ws[i]: [fs_i, E, NF] f32      conv_bs[i]: [1, NF] f32
    wfc       : [nb*NF, out_dim] f32   bfc : [1, out_dim] f32
    """
    V, E = emb_table.shape
    B, S = text.shape
    nb = len(filter_sizes)
    max_fs = max(filter_sizes)
    NF = n_filters
    output_dim = wfc.shape[1]
    NFP = _round_up(nb * NF, 128)       # lane-dense conv output (N) dimension
    OP = _round_up(output_dim, 128)     # lane-dense fc contraction-result padding
    Vp = _round_up(V, 128)              # lane-dense contraction (K) dimension

    # ---- fold the embedding table into one fused per-tap weight bank (trace glue) ----
    table_p = jnp.zeros((Vp, E), jnp.float32).at[:V, :].set(emb_table)
    wconv = jnp.zeros((max_fs, Vp, NFP), jnp.float32)
    bconv = jnp.zeros((1, NFP), jnp.float32)
    mask = jnp.zeros((S, NFP), jnp.float32)
    for i, fs in enumerate(filter_sizes):
        c0 = i * NF
        for k in range(fs):
            wconv = wconv.at[k, :, c0:c0 + NF].set(table_p @ conv_ws[i][k])
        bconv = bconv.at[0, c0:c0 + NF].set(conv_bs[i].reshape(-1))
        mask = mask.at[:S - fs + 1, c0:c0 + NF].set(1.0)
    wconv = wconv.astype(jnp.bfloat16)  # MXU-native; accumulation stays f32 in-kernel
    wfc_p = jnp.zeros((NFP, OP), jnp.float32).at[:nb * NF, :output_dim].set(wfc)
    bfc_p = jnp.zeros((1, OP), jnp.float32).at[0, :output_dim].set(bfc.reshape(-1))

    # ---- batch tiling: always >= 2 tiles (v7x megacore + pipeline overlap) -----------
    tb = min(block_b, max(8, _round_up(pl.cdiv(B, 2), 8)))
    B_pad = max(_round_up(B, tb), 2 * tb)
    grid = (B_pad // tb,)

    # ---- per-tap token-id columns (im2col of the tiny int tensor; cheap XLA glue) ----
    ids = jnp.pad(text.astype(jnp.int32),
                  ((0, B_pad - B), (0, max_fs - 1)))                  # [B_pad, S+max_fs-1]
    ids_col = jnp.stack([ids[:, k:k + S] for k in range(max_fs)], axis=0)  # [max_fs,B_pad,S]

    kernel = functools.partial(_textcnn_kernel, S, max_fs, output_dim)
    flops = 2 * B_pad * S * max_fs * Vp * NFP + 2 * B_pad * NFP * OP
    bytes_accessed = (ids_col.size * 4 + wconv.size * 2
                      + (mask.size + bconv.size + wfc_p.size + bfc_p.size) * 4
                      + B_pad * output_dim * 4)

    out = pl.pallas_call(
        kernel,
        out_shape=jax.ShapeDtypeStruct((B_pad, output_dim), jnp.float32),
        grid=grid,
        in_specs=[
            pl.BlockSpec((max_fs, tb, S), lambda b: (0, b, 0)),    # batch-tiled token ids
            pl.BlockSpec((max_fs, Vp, NFP), lambda b: (0, 0, 0)),  # resident fused emb+conv W
            pl.BlockSpec((1, NFP), lambda b: (0, 0)),              # resident conv bias
            pl.BlockSpec((S, NFP), lambda b: (0, 0)),              # resident time/channel mask
            pl.BlockSpec((NFP, OP), lambda b: (0, 0)),             # resident fc weight (padded)
            pl.BlockSpec((1, OP), lambda b: (0, 0)),               # resident fc bias (padded)
        ],
        out_specs=pl.BlockSpec((tb, output_dim), lambda b: (b, 0)),
        compiler_params=pltpu.CompilerParams(
            dimension_semantics=("parallel",),
            # ~16 MiB peak at tb=512: 48 MiB gives headroom on v5e/v6e (128 MiB VMEM)
            # while staying inside v7x's 64 MiB per-TC budget.
            vmem_limit_bytes=48 * 1024 * 1024,
        ),
        cost_estimate=pl.CostEstimate(
            flops=int(flops), transcendentals=0,
            bytes_accessed=int(bytes_accessed)),
    )(ids_col, wconv, bconv, mask, wfc_p, bfc_p)

    return out[:B]


def textcnn_reference(emb_table, text, conv_ws, conv_bs, wfc, bfc, *, filter_sizes):
    """Pure-JAX f32 reference mirroring the PyTorch forward (eval mode)."""
    emb = jnp.take(emb_table, text, axis=0)           # [B, S, E]
    B, S, _ = emb.shape
    pooled = []
    for w, b, fs in zip(conv_ws, conv_bs, filter_sizes):
        t_out = S - fs + 1
        acc = jnp.zeros((B, t_out, w.shape[-1]), jnp.float32)
        for k in range(fs):
            acc = acc + jnp.einsum("bte,ef->btf", emb[:, k:k + t_out, :], w[k])
        acc = jax.nn.relu(acc + b.reshape(1, 1, -1))
        pooled.append(jnp.max(acc, axis=1))
    cat = jnp.concatenate(pooled, axis=1)
    return cat @ wfc + bfc


if __name__ == "__main__":
    # Module hyperparameters (small, consistent with TextCNN.__init__)
    vocab_size = 50
    embedding_dim = 32
    n_filters = 16
    filter_sizes = (2, 3, 4)
    output_dim = 8
    batch = 2
    seq_len = 16

    key = jax.random.PRNGKey(0)
    k_emb, k_tok, k_fc, k_fcb, *k_convs = jax.random.split(key, 4 + 2 * len(filter_sizes))

    emb_table = jax.random.normal(k_emb, (vocab_size, embedding_dim), jnp.float32) * 0.1
    text = jax.random.randint(k_tok, (batch, seq_len), 0, vocab_size, jnp.int32)

    conv_ws, conv_bs = [], []
    for i, fs in enumerate(filter_sizes):
        kw, kb = k_convs[2 * i], k_convs[2 * i + 1]
        # PyTorch Conv2d weight [NF, 1, fs, E] stored here as [fs, E, NF]
        conv_ws.append(jax.random.normal(kw, (fs, embedding_dim, n_filters), jnp.float32) * 0.1)
        conv_bs.append(jax.random.normal(kb, (1, n_filters), jnp.float32) * 0.1)

    # PyTorch Linear weight [output_dim, in] stored here transposed as [in, output_dim]
    wfc = jax.random.normal(k_fc, (len(filter_sizes) * n_filters, output_dim), jnp.float32) * 0.1
    bfc = jax.random.normal(k_fcb, (1, output_dim), jnp.float32) * 0.1

    out = textcnn_forward(emb_table, text, conv_ws, conv_bs, wfc, bfc,
                          filter_sizes=filter_sizes, n_filters=n_filters)
    out = jax.block_until_ready(out)

    ref = textcnn_reference(emb_table, text, conv_ws, conv_bs, wfc, bfc,
                            filter_sizes=filter_sizes)
    assert out.shape == (batch, output_dim)
    # Only quantization vs the f32 reference is bf16 rounding of the folded
    # (emb_table @ conv_w) weight; tolerance covers that plus summation-order / MXU
    # default-precision differences.
    assert jnp.allclose(out, ref, atol=5e-3, rtol=5e-3), "mismatch vs reference"

    print("KERNEL_OK")
</pallas_src>

<mosaic_0001>
module attributes {stable_mosaic.version = 11 : i64} {
  func.func @_textcnn_kernel(%arg0: i32, %arg1: memref<4x8x16xi32, #tpu.memory_space<vmem>>, %arg2: memref<4x128x128xbf16, #tpu.memory_space<vmem>>, %arg3: memref<1x128xf32, #tpu.memory_space<vmem>>, %arg4: memref<16x128xf32, #tpu.memory_space<vmem>>, %arg5: memref<128x128xf32, #tpu.memory_space<vmem>>, %arg6: memref<1x128xf32, #tpu.memory_space<vmem>>, %arg7: memref<8x8xf32, #tpu.memory_space<vmem>>) attributes {dimension_semantics = [#tpu.dimension_semantics<parallel>], iteration_bounds = array<i64: 2>, scalar_prefetch = 0 : i64, scratch_operands = 0 : i64, tpu.core_type = #tpu.core_type<tc>, window_params = [{transform_indices = @transform_0, window_bounds = array<i64: 4, 8, 16>}, {pipeline_mode = #tpu.pipeline_mode<synchronous>, transform_indices = @transform_1, window_bounds = array<i64: 4, 128, 128>}, {pipeline_mode = #tpu.pipeline_mode<synchronous>, transform_indices = @transform_2, window_bounds = array<i64: 1, 128>}, {pipeline_mode = #tpu.pipeline_mode<synchronous>, transform_indices = @transform_3, window_bounds = array<i64: 16, 128>}, {pipeline_mode = #tpu.pipeline_mode<synchronous>, transform_indices = @transform_4, window_bounds = array<i64: 128, 128>}, {pipeline_mode = #tpu.pipeline_mode<synchronous>, transform_indices = @transform_5, window_bounds = array<i64: 1, 128>}, {transform_indices = @transform_6, window_bounds = array<i64: 8, 8>}]} {
    %0 = tpu.iota {dimensions = array<i32: 2>} : vector<1x1x128xi32>
    %c0 = arith.constant 0 : index
    %c0_0 = arith.constant 0 : index
    %1 = vector.load %arg3[%c0, %c0_0] : memref<1x128xf32, #tpu.memory_space<vmem>>, vector<1x128xf32>
    %2 = vector.shape_cast %1 : vector<1x128xf32> to vector<1x1x128xf32>
    %c0_1 = arith.constant 0 : index
    %c0_2 = arith.constant 0 : index
    %c0_3 = arith.constant 0 : index
    %3 = vector.load %arg1[%c0_1, %c0_2, %c0_3] : memref<4x8x16xi32, #tpu.memory_space<vmem>>, vector<1x8x16xi32>
    %4 = vector.shape_cast %3 : vector<1x8x16xi32> to vector<8x16xi32>
    %5 = vector.shape_cast %4 : vector<8x16xi32> to vector<8x16x1xi32>
    %6 = vector.broadcast %5 : vector<8x16x1xi32> to vector<8x16x128xi32>
    %7 = vector.broadcast %0 : vector<1x1x128xi32> to vector<8x16x128xi32>
    %8 = arith.cmpi eq, %6, %7 : vector<8x16x128xi32>
    %9 = arith.extui %8 : vector<8x16x128xi1> to vector<8x16x128xi32>
    %10 = arith.sitofp %9 : vector<8x16x128xi32> to vector<8x16x128xf32>
    %11 = arith.truncf %10 : vector<8x16x128xf32> to vector<8x16x128xbf16>
    %c0_4 = arith.constant 0 : index
    %c0_5 = arith.constant 0 : index
    %c0_6 = arith.constant 0 : index
    %12 = vector.load %arg2[%c0_4, %c0_5, %c0_6] : memref<4x128x128xbf16, #tpu.memory_space<vmem>>, vector<1x128x128xbf16>
    %13 = vector.shape_cast %12 : vector<1x128x128xbf16> to vector<128x128xbf16>
    "tpu.trace_start"() <{level = 10 : i32, message = "btv,vf->btf"}> : () -> ()
    %cst = arith.constant dense<0.000000e+00> : vector<8x16x128xf32>
    %14 = tpu.matmul %11, %13, %cst {dimension_numbers = #tpu.dot_dimension_numbers<[2], [0], [0, 1], [1], [0, 0, 0, 1, 1, 1], [], []>} : vector<8x16x128xbf16>, vector<128x128xbf16>, vector<8x16x128xf32> -> vector<8x16x128xf32>
    "tpu.trace_stop"() : () -> ()
    %15 = vector.broadcast %2 : vector<1x1x128xf32> to vector<8x16x128xf32>
    %16 = arith.addf %15, %14 : vector<8x16x128xf32>
    %c1 = arith.constant 1 : index
    %c0_7 = arith.constant 0 : index
    %c0_8 = arith.constant 0 : index
    %17 = vector.load %arg1[%c1, %c0_7, %c0_8] : memref<4x8x16xi32, #tpu.memory_space<vmem>>, vector<1x8x16xi32>
    %18 = vector.shape_cast %17 : vector<1x8x16xi32> to vector<8x16xi32>
    %19 = vector.shape_cast %18 : vector<8x16xi32> to vector<8x16x1xi32>
    %20 = vector.broadcast %19 : vector<8x16x1xi32> to vector<8x16x128xi32>
    %21 = vector.broadcast %0 : vector<1x1x128xi32> to vector<8x16x128xi32>
    %22 = arith.cmpi eq, %20, %21 : vector<8x16x128xi32>
    %23 = arith.extui %22 : vector<8x16x128xi1> to vector<8x16x128xi32>
    %24 = arith.sitofp %23 : vector<8x16x128xi32> to vector<8x16x128xf32>
    %25 = arith.truncf %24 : vector<8x16x128xf32> to vector<8x16x128xbf16>
    %c1_9 = arith.constant 1 : index
    %c0_10 = arith.constant 0 : index
    %c0_11 = arith.constant 0 : index
    %26 = vector.load %arg2[%c1_9, %c0_10, %c0_11] : memref<4x128x128xbf16, #tpu.memory_space<vmem>>, vector<1x128x128xbf16>
    %27 = vector.shape_cast %26 : vector<1x128x128xbf16> to vector<128x128xbf16>
    "tpu.trace_start"() <{level = 10 : i32, message = "btv,vf->btf"}> : () -> ()
    %cst_12 = arith.constant dense<0.000000e+00> : vector<8x16x128xf32>
    %28 = tpu.matmul %25, %27, %cst_12 {dimension_numbers = #tpu.dot_dimension_numbers<[2], [0], [0, 1], [1], [0, 0, 0, 1, 1, 1], [], []>} : vector<8x16x128xbf16>, vector<128x128xbf16>, vector<8x16x128xf32> -> vector<8x16x128xf32>
    "tpu.trace_stop"() : () -> ()
    %29 = arith.addf %16, %28 : vector<8x16x128xf32>
    %c2 = arith.constant 2 : index
    %c0_13 = arith.constant 0 : index
    %c0_14 = arith.constant 0 : index
    %30 = vector.load %arg1[%c2, %c0_13, %c0_14] : memref<4x8x16xi32, #tpu.memory_space<vmem>>, vector<1x8x16xi32>
    %31 = vector.shape_cast %30 : vector<1x8x16xi32> to vector<8x16xi32>
    %32 = vector.shape_cast %31 : vector<8x16xi32> to vector<8x16x1xi32>
    %33 = vector.broadcast %32 : vector<8x16x1xi32> to vector<8x16x128xi32>
    %34 = vector.broadcast %0 : vector<1x1x128xi32> to vector<8x16x128xi32>
    %35 = arith.cmpi eq, %33, %34 : vector<8x16x128xi32>
    %36 = arith.extui %35 : vector<8x16x128xi1> to vector<8x16x128xi32>
    %37 = arith.sitofp %36 : vector<8x16x128xi32> to vector<8x16x128xf32>
    %38 = arith.truncf %37 : vector<8x16x128xf32> to vector<8x16x128xbf16>
    %c2_15 = arith.constant 2 : index
    %c0_16 = arith.constant 0 : index
    %c0_17 = arith.constant 0 : index
    %39 = vector.load %arg2[%c2_15, %c0_16, %c0_17] : memref<4x128x128xbf16, #tpu.memory_space<vmem>>, vector<1x128x128xbf16>
    %40 = vector.shape_cast %39 : vector<1x128x128xbf16> to vector<128x128xbf16>
    "tpu.trace_start"() <{level = 10 : i32, message = "btv,vf->btf"}> : () -> ()
    %cst_18 = arith.constant dense<0.000000e+00> : vector<8x16x128xf32>
    %41 = tpu.matmul %38, %40, %cst_18 {dimension_numbers = #tpu.dot_dimension_numbers<[2], [0], [0, 1], [1], [0, 0, 0, 1, 1, 1], [], []>} : vector<8x16x128xbf16>, vector<128x128xbf16>, vector<8x16x128xf32> -> vector<8x16x128xf32>
    "tpu.trace_stop"() : () -> ()
    %42 = arith.addf %29, %41 : vector<8x16x128xf32>
    %c3 = arith.constant 3 : index
    %c0_19 = arith.constant 0 : index
    %c0_20 = arith.constant 0 : index
    %43 = vector.load %arg1[%c3, %c0_19, %c0_20] : memref<4x8x16xi32, #tpu.memory_space<vmem>>, vector<1x8x16xi32>
    %44 = vector.shape_cast %43 : vector<1x8x16xi32> to vector<8x16xi32>
    %45 = vector.shape_cast %44 : vector<8x16xi32> to vector<8x16x1xi32>
    %46 = vector.broadcast %45 : vector<8x16x1xi32> to vector<8x16x128xi32>
    %47 = vector.broadcast %0 : vector<1x1x128xi32> to vector<8x16x128xi32>
    %48 = arith.cmpi eq, %46, %47 : vector<8x16x128xi32>
    %49 = arith.extui %48 : vector<8x16x128xi1> to vector<8x16x128xi32>
    %50 = arith.sitofp %49 : vector<8x16x128xi32> to vector<8x16x128xf32>
    %51 = arith.truncf %50 : vector<8x16x128xf32> to vector<8x16x128xbf16>
    %c3_21 = arith.constant 3 : index
    %c0_22 = arith.constant 0 : index
    %c0_23 = arith.constant 0 : index
    %52 = vector.load %arg2[%c3_21, %c0_22, %c0_23] : memref<4x128x128xbf16, #tpu.memory_space<vmem>>, vector<1x128x128xbf16>
    %53 = vector.shape_cast %52 : vector<1x128x128xbf16> to vector<128x128xbf16>
    "tpu.trace_start"() <{level = 10 : i32, message = "btv,vf->btf"}> : () -> ()
    %cst_24 = arith.constant dense<0.000000e+00> : vector<8x16x128xf32>
    %54 = tpu.matmul %51, %53, %cst_24 {dimension_numbers = #tpu.dot_dimension_numbers<[2], [0], [0, 1], [1], [0, 0, 0, 1, 1, 1], [], []>} : vector<8x16x128xbf16>, vector<128x128xbf16>, vector<8x16x128xf32> -> vector<8x16x128xf32>
    "tpu.trace_stop"() : () -> ()
    %55 = arith.addf %42, %54 : vector<8x16x128xf32>
    %cst_25 = arith.constant 0.000000e+00 : f32
    %56 = vector.broadcast %cst_25 : f32 to vector<8x16x128xf32>
    %57 = arith.maximumf %55, %56 : vector<8x16x128xf32>
    %c0_26 = arith.constant 0 : index
    %c0_27 = arith.constant 0 : index
    %58 = vector.load %arg4[%c0_26, %c0_27] : memref<16x128xf32, #tpu.memory_space<vmem>>, vector<16x128xf32>
    %59 = vector.shape_cast %58 : vector<16x128xf32> to vector<1x16x128xf32>
    %60 = vector.broadcast %59 : vector<1x16x128xf32> to vector<8x16x128xf32>
    %61 = arith.mulf %57, %60 : vector<8x16x128xf32>
    %cst_28 = arith.constant dense<0xFF800000> : vector<8x128xf32>
    %62 = vector.multi_reduction <maximumf>, %61, %cst_28 [1] : vector<8x16x128xf32> to vector<8x128xf32>
    %c0_29 = arith.constant 0 : index
    %c0_30 = arith.constant 0 : index
    %63 = vector.load %arg5[%c0_29, %c0_30] : memref<128x128xf32, #tpu.memory_space<vmem>>, vector<128x128xf32>
    %cst_31 = arith.constant dense<0.000000e+00> : vector<8x128xf32>
    %64 = tpu.matmul %62, %63, %cst_31 {dimension_numbers = #tpu.dot_dimension_numbers<[1], [0], [0], [1], [0, 0, 1, 1], [], []>} : vector<8x128xf32>, vector<128x128xf32>, vector<8x128xf32> -> vector<8x128xf32>
    %c0_32 = arith.constant 0 : index
    %c0_33 = arith.constant 0 : index
    %65 = vector.load %arg6[%c0_32, %c0_33] : memref<1x128xf32, #tpu.memory_space<vmem>>, vector<1x128xf32>
    %66 = vector.broadcast %65 : vector<1x128xf32> to vector<8x128xf32>
    %67 = arith.addf %64, %66 : vector<8x128xf32>
    %68 = vector.extract_strided_slice %67 {offsets = [0, 0], sizes = [8, 8], strides = [1, 1]} : vector<8x128xf32> to vector<8x8xf32>
    %c0_34 = arith.constant 0 : index
    %c0_35 = arith.constant 0 : index
    %69 = vector.load %arg7[%c0_34, %c0_35] : memref<8x8xf32, #tpu.memory_space<vmem>>, vector<8x8xf32>
    tpu.vector_store %arg7[%c0_34, %c0_35], %68 {strides = array<i32>} : memref<8x8xf32, #tpu.memory_space<vmem>>, vector<8x8xf32>,
    return
  }
  func.func @transform_0(%arg0: i32) -> (i32, i32, i32) {
    %c0_i32 = arith.constant 0 : i32
    %c0_i32_0 = arith.constant 0 : i32
    %c0_i32_1 = arith.constant 0 : i32
    return %c0_i32, %arg0, %c0_i32_0 : i32, i32, i32
  }
  func.func @transform_1(%arg0: i32) -> (i32, i32, i32) {
    %c0_i32 = arith.constant 0 : i32
    %c0_i32_0 = arith.constant 0 : i32
    %c0_i32_1 = arith.constant 0 : i32
    %c0_i32_2 = arith.constant 0 : i32
    return %c0_i32, %c0_i32_0, %c0_i32_1 : i32, i32, i32
  }
  func.func @transform_2(%arg0: i32) -> (i32, i32) {
    %c0_i32 = arith.constant 0 : i32
    %c0_i32_0 = arith.constant 0 : i32
    %c0_i32_1 = arith.constant 0 : i32
    return %c0_i32, %c0_i32_0 : i32, i32
  }
  func.func @transform_3(%arg0: i32) -> (i32, i32) {
    %c0_i32 = arith.constant 0 : i32
    %c0_i32_0 = arith.constant 0 : i32
    %c0_i32_1 = arith.constant 0 : i32
    return %c0_i32, %c0_i32_0 : i32, i32
  }
  func.func @transform_4(%arg0: i32) -> (i32, i32) {
    %c0_i32 = arith.constant 0 : i32
    %c0_i32_0 = arith.constant 0 : i32
    %c0_i32_1 = arith.constant 0 : i32
    return %c0_i32, %c0_i32_0 : i32, i32
  }
  func.func @transform_5(%arg0: i32) -> (i32, i32) {
    %c0_i32 = arith.constant 0 : i32
    %c0_i32_0 = arith.constant 0 : i32
    %c0_i32_1 = arith.constant 0 : i32
    return %c0_i32, %c0_i32_0 : i32, i32
  }
  func.func @transform_6(%arg0: i32) -> (i32, i32) {
    %c0_i32 = arith.constant 0 : i32
    %c0_i32_0 = arith.constant 0 : i32
    return %arg0, %c0_i32 : i32, i32
  }
}

</mosaic_0001>

<llo_original>
// kernel: tpu_custom_call.1
$region0: #{tpu_custom_call.1}
  #allocation0 [shape = 'u32[]', space=smem, size = 0x4, offset = 0x4, fixed_abs, tag = 'smem constant byte address 0x4 - core index']
  #allocation1 [shape = 'u32[72,128]{1,0:T(1,128)}', space=vmem, size = 0x9000, scoped, tag = 'internal scratch']
  %s0 = inlined_call_operand.hbm [shape: s32[4,16,16], index: 0, kind: input, shape index: {}]
  %s1 = inlined_call_operand.hbm [shape: bf16[4,128,128], index: 1, kind: input, shape index: {}]
  %s2 = inlined_call_operand.vmem [shape: f32[1,128], index: 2, kind: input, shape index: {}]
  %s3 = inlined_call_operand.hbm [shape: f32[16,128], index: 3, kind: input, shape index: {}]
  %s4 = inlined_call_operand.hbm [shape: f32[128,128], index: 4, kind: input, shape index: {}]
  %s5 = inlined_call_operand.vmem [shape: f32[1,128], index: 5, kind: input, shape index: {}]
  %s6 = inlined_call_operand.vmem [shape: f32[16,8], index: 6, kind: output, shape index: {}]
  %s7 = sld [smem:[#allocation0]]
  $region73: #{tpu_custom_call.1} parent=0
    _
  %s9 = ssub.s32 1, %s7
  %s10 = scalar_select 0, %s9, %s7
  $region1: #{tpu_custom_call.1} parent=0
    #allocation2 [shape = 'u8[32768]{0}', space=vmem, size = 0x8000, scoped, tag = 'input window, operand 0']
    #allocation3 [shape = 's32[2]{0}', space=sflag, size = 0x8, scoped, tag = 'scoped memory for tpu_custom_call.1']
    #allocation4 [shape = 'u8[131072]{0}', space=vmem, size = 0x20000, scoped, tag = 'input window, operand 1, single buffered']
    #allocation5 [shape = 's32[1]{0}', space=sflag, size = 0x4, scoped, tag = 'scoped memory for tpu_custom_call.1']
    #allocation6 [shape = 'u8[8192]{0}', space=vmem, size = 0x2000, scoped, tag = 'input window, operand 3, single buffered']
    #allocation7 [shape = 'u8[65536]{0}', space=vmem, size = 0x10000, scoped, tag = 'input window, operand 4, single buffered']
    #allocation8 [shape = 's32[1]{0}', space=sflag, size = 0x4, scoped, tag = 'scoped memory for tpu_custom_call.1']
    %11 = vsyncpa [#allocation3], 0
    %s12 = scalar_lea.sflag [#allocation3], 1
    %13 = vsyncpa %s12, 0
    %14 = vsyncpa [#allocation5], 0
    %15 = vsyncpa [#allocation8], 0
    loop: start=0, step=1, limit=4
    $region2: #{tpu_custom_call.1} parent=1 // loop_pre_header
      _
    $region3: #{tpu_custom_call.1} parent=1 // loop_header
      %s17 = sphi 0, %s21
      %p18 = scmp.ge.s32.totalorder %s17, 4
      %s27 = sphi 0, %s29
      %s30 = sphi 0, %s27
      %s31 = sphi 0, %s30
      %s47 = sphi 0, %s31
      %s51 = sphi 0, %s51
      %s53 = sphi 0, %s51
      %s54 = sphi 0, %s53
      %s68 = sphi 0, %s54
      %s72 = sphi 0, %s72
      %s74 = sphi 0, %s72
      %s75 = sphi 0, %s74
      %s89 = sphi 0, %s75
      %s93 = sphi 0, %s93
      %s95 = sphi 0, %s93
      %s96 = sphi 0, %s95
      %s110 = sphi 0, %s96
      %s114 = sphi 0, %s114
      %s116 = sphi 0, %s114
      %s117 = sphi 0, %s116
      %s131 = sphi 0, %s117
      %s135 = sphi 0, %s135
      %s137 = sphi 0, %s135
      %s138 = sphi 0, %s137
      %s152 = sphi 0, %s138
      %s158 = sphi 0, %s160
      %s161 = sphi 0, %s158
      %s162 = sphi 0, %s161
      %s178 = sphi 0, %s162
    $region4: #{tpu_custom_call.1} parent=1 // loop_header_branch
      %20 = sbr.rel (%p18) target = $region8
    $region5: #{tpu_custom_call.1} parent=1 // loop_body
      %s22 = ssub.s32 %s17, 1
      %s23 = ssub.s32 %s17, 2
      %s24 = sadd.s32 %s17, 1
      %s25 = ssub.s32 %s17, %s24
      %p26 = scmp.eq.s32.totalorder %s25, 0
      %s28 = sadd.s32 %s27, 1
      %s29 = scalar_select %p26, %s27, %s28
      %p32 = pneg %p26
      %p33 = scmp.eq.s32.totalorder %s17, 1
      %p34 = por %p32, %p33
      %p35 = scmp.ne.s32.totalorder %s27, %s30
      %p36 = scmp.eq.s32.totalorder %s17, 0
      %p37 = por %p35, %p36
      %p38 = scmp.ne.s32.totalorder %s27, %s30
      %p39 = scmp.eq.s32.totalorder %s22, 1
      %p40 = por %p38, %p39
      %p41 = scmp.ne.s32.totalorder %s30, %s31
      %p42 = scmp.eq.s32.totalorder %s22, 0
      %p43 = por %p41, %p42
      %p44 = scmp.ne.s32.totalorder %s30, %s31
      %p45 = scmp.eq.s32.totalorder %s23, 1
      %p46 = por %p44, %p45
      %p48 = scmp.ne.s32.totalorder %s31, %s47
      %p49 = scmp.eq.s32.totalorder %s23, 0
      %p50 = por %p48, %p49
      %s52 = sadd.s32 %s51, 1
      %p55 = scmp.eq.s32.totalorder %s17, 1
      %p56 = scmp.ne.s32.totalorder %s51, %s53
      %p57 = scmp.eq.s32.totalorder %s17, 0
      %p58 = por %p56, %p57
      %p59 = scmp.ne.s32.totalorder %s51, %s53
      %p60 = scmp.eq.s32.totalorder %s22, 1
      %p61 = por %p59, %p60
      %p62 = scmp.ne.s32.totalorder %s53, %s54
      %p63 = scmp.eq.s32.totalorder %s22, 0
      %p64 = por %p62, %p63
      %p65 = scmp.ne.s32.totalorder %s53, %s54
      %p66 = scmp.eq.s32.totalorder %s23, 1
      %p67 = por %p65, %p66
      %p69 = scmp.ne.s32.totalorder %s54, %s68
      %p70 = scmp.eq.s32.totalorder %s23, 0
      %p71 = por %p69, %p70
      %s73 = sadd.s32 %s72, 1
      %p76 = scmp.eq.s32.totalorder %s17, 1
      %p77 = scmp.ne.s32.totalorder %s72, %s74
      %p78 = scmp.eq.s32.totalorder %s17, 0
      %p79 = por %p77, %p78
      %p80 = scmp.ne.s32.totalorder %s72, %s74
      %p81 = scmp.eq.s32.totalorder %s22, 1
      %p82 = por %p80, %p81
      %p83 = scmp.ne.s32.totalorder %s74, %s75
      %p84 = scmp.eq.s32.totalorder %s22, 0
      %p85 = por %p83, %p84
      %p86 = scmp.ne.s32.totalorder %s74, %s75
      %p87 = scmp.eq.s32.totalorder %s23, 1
      %p88 = por %p86, %p87
      %p90 = scmp.ne.s32.totalorder %s75, %s89
      %p91 = scmp.eq.s32.totalorder %s23, 0
      %p92 = por %p90, %p91
      %s94 = sadd.s32 %s93, 1
      %p97 = scmp.eq.s32.totalorder %s17, 1
      %p98 = scmp.ne.s32.totalorder %s93, %s95
      %p99 = scmp.eq.s32.totalorder %s17, 0
      %p100 = por %p98, %p99
      %p101 = scmp.ne.s32.totalorder %s93, %s95
      %p102 = scmp.eq.s32.totalorder %s22, 1
      %p103 = por %p101, %p102
      %p104 = scmp.ne.s32.totalorder %s95, %s96
      %p105 = scmp.eq.s32.totalorder %s22, 0
      %p106 = por %p104, %p105
      %p107 = scmp.ne.s32.totalorder %s95, %s96
      %p108 = scmp.eq.s32.totalorder %s23, 1
      %p109 = por %p107, %p108
      %p111 = scmp.ne.s32.totalorder %s96, %s110
      %p112 = scmp.eq.s32.totalorder %s23, 0
      %p113 = por %p111, %p112
      %s115 = sadd.s32 %s114, 1
      %p118 = scmp.eq.s32.totalorder %s17, 1
      %p119 = scmp.ne.s32.totalorder %s114, %s116
      %p120 = scmp.eq.s32.totalorder %s17, 0
      %p121 = por %p119, %p120
      %p122 = scmp.ne.s32.totalorder %s114, %s116
      %p123 = scmp.eq.s32.totalorder %s22, 1
      %p124 = por %p122, %p123
      %p125 = scmp.ne.s32.totalorder %s116, %s117
      %p126 = scmp.eq.s32.totalorder %s22, 0
      %p127 = por %p125, %p126
      %p128 = scmp.ne.s32.totalorder %s116, %s117
      %p129 = scmp.eq.s32.totalorder %s23, 1
      %p130 = por %p128, %p129
      %p132 = scmp.ne.s32.totalorder %s117, %s131
      %p133 = scmp.eq.s32.totalorder %s23, 0
      %p134 = por %p132, %p133
      %s136 = sadd.s32 %s135, 1
      %p139 = scmp.eq.s32.totalorder %s17, 1
      %p140 = scmp.ne.s32.totalorder %s135, %s137
      %p141 = scmp.eq.s32.totalorder %s17, 0
      %p142 = por %p140, %p141
      %p143 = scmp.ne.s32.totalorder %s135, %s137
      %p144 = scmp.eq.s32.totalorder %s22, 1
      %p145 = por %p143, %p144
      %p146 = scmp.ne.s32.totalorder %s137, %s138
      %p147 = scmp.eq.s32.totalorder %s22, 0
      %p148 = por %p146, %p147
      %p149 = scmp.ne.s32.totalorder %s137, %s138
      %p150 = scmp.eq.s32.totalorder %s23, 1
      %p151 = por %p149, %p150
      %p153 = scmp.ne.s32.totalorder %s138, %s152
      %p154 = scmp.eq.s32.totalorder %s23, 0
      %p155 = por %p153, %p154
      %s156 = ssub.s32 %s17, %s24
      %p157 = scmp.eq.s32.totalorder %s156, 0
      %s159 = sadd.s32 %s158, 1
      %s160 = scalar_select %p157, %s158, %s159
      %p163 = pneg %p157
      %p164 = scmp.eq.s32.totalorder %s17, 1
      %p165 = por %p163, %p164
      %p166 = scmp.ne.s32.totalorder %s158, %s161
      %p167 = scmp.eq.s32.totalorder %s17, 0
      %p168 = por %p166, %p167
      %p169 = scmp.ne.s32.totalorder %s158, %s161
      %p170 = scmp.eq.s32.totalorder %s22, 1
      %p171 = por %p169, %p170
      %p172 = scmp.ne.s32.totalorder %s161, %s162
      %p173 = scmp.eq.s32.totalorder %s22, 0
      %p174 = por %p172, %p173
      %p175 = scmp.ne.s32.totalorder %s161, %s162
      %p176 = scmp.eq.s32.totalorder %s23, 1
      %p177 = por %p175, %p176
      %p179 = scmp.ne.s32.totalorder %s162, %s178
      %p180 = scmp.eq.s32.totalorder %s23, 0
      %p181 = por %p179, %p180
      %p182 = scmp.le.s32.totalorder 1, %s17
      %p183 = scmp.lt.s32.totalorder %s17, 3
      %p184 = pnand %p182, %p183
      %p185 = pneg %p184
      // Predicated region
      $region9: #{tpu_custom_call.1} parent=5 // pred_check
        _
      $region10: #{tpu_custom_call.1} parent=5 // pred_check_branch
        %187 = sbr.rel (%p184) target = $region12
      $region11: #{tpu_custom_call.1} parent=5 // pred_region
        %s188 = ssub.s32 %s17, 1
        // Predicated region
        $region13: #{tpu_custom_call.1} parent=11 // pred_check
          %p189 = pneg %p64
        $region14: #{tpu_custom_call.1} parent=11 // pred_check_branch
          %191 = sbr.rel (%p189) target = $region16
        $region15: #{tpu_custom_call.1} parent=11 // pred_region
          %193 = vsyncadd [#allocation5], 0
          %s194 = sshll.u32 %s1, 4
          %s195 = int_to_ptr.hbm [resolvable:$true] %s194
          %s196 = sshll.u32 [#allocation4], 4
          %s197 = int_to_ptr.vmem [resolvable:$true] %s196
          %202 = dma.hbm_to_vmem [thread:$0]  %s195, 4096, %s197, [#allocation5], 64, 64, 4
        $region16: #{tpu_custom_call.1} parent=11 // pred_fallthru
          _
        // Predicated region
        $region17: #{tpu_custom_call.1} parent=11 // pred_check
          %p203 = pneg %p85
        $region18: #{tpu_custom_call.1} parent=11 // pred_check_branch
          %205 = sbr.rel (%p203) target = $region20
        $region19: #{tpu_custom_call.1} parent=11 // pred_region
          _
        $region20: #{tpu_custom_call.1} parent=11 // pred_fallthru
          _
        // Predicated region
        $region21: #{tpu_custom_call.1} parent=11 // pred_check
          %p206 = pneg %p106
        $region22: #{tpu_custom_call.1} parent=11 // pred_check_branch
          %208 = sbr.rel (%p206) target = $region24
        $region23: #{tpu_custom_call.1} parent=11 // pred_region
          %210 = vsyncadd [#allocation5], 0
          %s211 = sshll.u32 %s3, 4
          %s212 = int_to_ptr.hbm [resolvable:$true] %s211
          %s213 = sshll.u32 [#allocation6], 4
          %s214 = int_to_ptr.vmem [resolvable:$true] %s213
          %219 = dma.hbm_to_vmem [thread:$0]  %s212, 256, %s214, [#allocation5], 128, 128, 8
        $region24: #{tpu_custom_call.1} parent=11 // pred_fallthru
          _
        // Predicated region
        $region25: #{tpu_custom_call.1} parent=11 // pred_check
          %p220 = pneg %p127
        $region26: #{tpu_custom_call.1} parent=11 // pred_check_branch
          %222 = sbr.rel (%p220) target = $region28
        $region27: #{tpu_custom_call.1} parent=11 // pred_region
          %224 = vsyncadd [#allocation8], 0
          %s225 = sshll.u32 %s4, 4
          %s226 = int_to_ptr.hbm [resolvable:$true] %s225
          %s227 = sshll.u32 [#allocation7], 4
          %s228 = int_to_ptr.vmem [resolvable:$true] %s227
          %233 = dma.hbm_to_vmem [thread:$0]  %s226, 2048, %s228, [#allocation8], 128, 128, 8
        $region28: #{tpu_custom_call.1} parent=11 // pred_fallthru
          _
        // Predicated region
        $region29: #{tpu_custom_call.1} parent=11 // pred_check
          %p234 = pneg %p148
        $region30: #{tpu_custom_call.1} parent=11 // pred_check_branch
          %236 = sbr.rel (%p234) target = $region32
        $region31: #{tpu_custom_call.1} parent=11 // pred_region
          _
        $region32: #{tpu_custom_call.1} parent=11 // pred_fallthru
          _
      $region12: #{tpu_custom_call.1} parent=5 // pred_fallthru
        _
      %p237 = scmp.lt.s32.totalorder %s17, 2
      // Predicated region
      $region33: #{tpu_custom_call.1} parent=5 // pred_check
        %p238 = pneg %p237
      $region34: #{tpu_custom_call.1} parent=5 // pred_check_branch
        %240 = sbr.rel (%p238) target = $region36
      $region35: #{tpu_custom_call.1} parent=5 // pred_region
        // Predicated region
        $region37: #{tpu_custom_call.1} parent=35 // pred_check
          %p241 = pneg %p37
        $region38: #{tpu_custom_call.1} parent=35 // pred_check_branch
          %243 = sbr.rel (%p241) target = $region40
        $region39: #{tpu_custom_call.1} parent=35 // pred_region
          %s244 = sand.u32 %s27, 1
          %s245 = scalar_lea.sflag [#allocation3], %s244
          %s246 = sand.u32 %s27, 1
          %s247 = smul.addr %s246, 32
          %s248 = scalar_lea.vmem [#allocation2], %s247
          %250 = vsyncadd %s245, 0
          %s251 = smul.addr %s17, 8
          %s252 = scalar_lea.hbm %s0, %s251
          %s253 = sshll.u32 %s252, 4
          %s254 = int_to_ptr.hbm [resolvable:$true] %s253
          %s255 = sshll.u32 %s248, 4
          %s256 = int_to_ptr.vmem [resolvable:$true] %s255
          %261 = dma.hbm_to_vmem [thread:$0]  %s254, 512, %s256, %s245, 256, 128, 8
        $region40: #{tpu_custom_call.1} parent=35 // pred_fallthru
          _
      $region36: #{tpu_custom_call.1} parent=5 // pred_fallthru
        _
      %p262 = scmp.le.s32.totalorder 1, %s17
      %p263 = scmp.lt.s32.totalorder %s17, 3
      %p264 = pnand %p262, %p263
      %p265 = pneg %p264
      // Predicated region
      $region41: #{tpu_custom_call.1} parent=5 // pred_check
        _
      $region42: #{tpu_custom_call.1} parent=5 // pred_check_branch
        %267 = sbr.rel (%p264) target = $region44
      $region43: #{tpu_custom_call.1} parent=5 // pred_region
        %s268 = ssub.s32 %s17, 1
        %s269 = sand.u32 %s30, 1
        %s270 = scalar_lea.sflag [#allocation3], %s269
        %s271 = sand.u32 %s30, 1
        %s272 = smul.addr %s271, 32
        %s273 = scalar_lea.vmem [#allocation2], %s272
        // Predicated region
        $region45: #{tpu_custom_call.1} parent=43 // pred_check
          %p274 = pneg %p43
        $region46: #{tpu_custom_call.1} parent=43 // pred_check_branch
          %276 = sbr.rel (%p274) target = $region48
        $region47: #{tpu_custom_call.1} parent=43 // pred_region
          %278 = dma.done %s270, 512
        $region48: #{tpu_custom_call.1} parent=43 // pred_fallthru
          _
        // Predicated region
        $region49: #{tpu_custom_call.1} parent=43 // pred_check
          %p279 = pneg %p64
        $region50: #{tpu_custom_call.1} parent=43 // pred_check_branch
          %281 = sbr.rel (%p279) target = $region52
        $region51: #{tpu_custom_call.1} parent=43 // pred_region
          %283 = dma.done [#allocation5], 4096
        $region52: #{tpu_custom_call.1} parent=43 // pred_fallthru
          _
        // Predicated region
        $region53: #{tpu_custom_call.1} parent=43 // pred_check
          %p284 = pneg %p106
        $region54: #{tpu_custom_call.1} parent=43 // pred_check_branch
          %286 = sbr.rel (%p284) target = $region56
        $region55: #{tpu_custom_call.1} parent=43 // pred_region
          %288 = dma.done [#allocation5], 256
        $region56: #{tpu_custom_call.1} parent=43 // pred_fallthru
          _
        // Predicated region
        $region57: #{tpu_custom_call.1} parent=43 // pred_check
          %p289 = pneg %p127
        $region58: #{tpu_custom_call.1} parent=43 // pred_check_branch
          %291 = sbr.rel (%p289) target = $region60
        $region59: #{tpu_custom_call.1} parent=43 // pred_region
          %293 = dma.done [#allocation8], 2048
        $region60: #{tpu_custom_call.1} parent=43 // pred_fallthru
          _
        %s294 = sand.u32 %s30, 1
        %s295 = scalar_lea.sflag [#allocation3], %s294
        %s296 = sand.u32 %s30, 1
        %s297 = smul.addr %s296, 32
        %s298 = scalar_lea.vmem [#allocation2], %s297
        %p299 = pneg %p43
        %p300 = pneg %p40
        %p301 = pneg %p64
        %p302 = pneg %p61
        %p303 = pneg %p85
        %p304 = pneg %p82
        %p305 = pneg %p106
        %p306 = pneg %p103
        %p307 = pneg %p127
        %p308 = pneg %p124
        %p309 = pneg %p148
        %p310 = pneg %p145
        %p311 = pneg %p174
        %p312 = pneg %p171
        %p313 = scmp.lt.s32.totalorder %s22, 1
        %s314 = scalar_select %p313, %s22, 1
        %s315 = smul.addr %s314, 8
        %s316 = scalar_lea.vmem %s6, %s315
        %p317 = scmp.lt.s32.totalorder %s22, 1
        %s318 = scalar_select %p317, %s22, 1
        %s319 = smul.addr %s318, 8
        %s320 = scalar_lea.vmem %s6, %s319
        %v321 = vlaneseq
        %v322 = vand.u32 %v321, 127
        %v323 = vld [vmem:[%s2] sm:$0x1]
        %v324 = vld [vmem:[%s273] sm:$0xff]
        %v325 = vperm.slane %v324, 0
        %v326 = vlaneseq
        %v327 = vshrl.u32 %v326, 7
        %329 = vset.pattern.permute.xlu0 %v327
        %330 = vperm.xlu0 %329, %v325
        %v331 = vpop.permute.xlu0 %330
        %v332 = vlaneseq
        %v333 = vshrl.u32 %v332, 7
        %v334 = vadd.s32 %v333, 8
        %335 = vset.pattern.permute.xlu0 %v334
        %336 = vperm.xlu0 %335, %v325
        %v337 = vpop.permute.xlu0 %336
        %v338 = vperm.slane %v324, 1
        %v339 = vlaneseq
        %v340 = vshrl.u32 %v339, 7
        %342 = vset.pattern.permute.xlu0 %v340
        %343 = vperm.xlu0 %342, %v338
        %v344 = vpop.permute.xlu0 %343
        %v345 = vlaneseq
        %v346 = vshrl.u32 %v345, 7
        %v347 = vadd.s32 %v346, 8
        %348 = vset.pattern.permute.xlu0 %v347
        %349 = vperm.xlu0 %348, %v338
        %v350 = vpop.permute.xlu0 %349
        %v351 = vperm.slane %v324, 2
        %v352 = vlaneseq
        %v353 = vshrl.u32 %v352, 7
        %355 = vset.pattern.permute.xlu0 %v353
        %356 = vperm.xlu0 %355, %v351
        %v357 = vpop.permute.xlu0 %356
        %v358 = vlaneseq
        %v359 = vshrl.u32 %v358, 7
        %v360 = vadd.s32 %v359, 8
        %361 = vset.pattern.permute.xlu0 %v360
        %362 = vperm.xlu0 %361, %v351
        %v363 = vpop.permute.xlu0 %362
        %v364 = vperm.slane %v324, 3
        %v365 = vlaneseq
        %v366 = vshrl.u32 %v365, 7
        %368 = vset.pattern.permute.xlu0 %v366
        %369 = vperm.xlu0 %368, %v364
        %v370 = vpop.permute.xlu0 %369
        %v371 = vlaneseq
        %v372 = vshrl.u32 %v371, 7
        %v373 = vadd.s32 %v372, 8
        %374 = vset.pattern.permute.xlu0 %v373
        %375 = vperm.xlu0 %374, %v364
        %v376 = vpop.permute.xlu0 %375
        %v377 = vperm.slane %v324, 4
        %v378 = vlaneseq
        %v379 = vshrl.u32 %v378, 7
        %381 = vset.pattern.permute.xlu0 %v379
        %382 = vperm.xlu0 %381, %v377
        %v383 = vpop.permute.xlu0 %382
        %v384 = vlaneseq
        %v385 = vshrl.u32 %v384, 7
        %v386 = vadd.s32 %v385, 8
        %387 = vset.pattern.permute.xlu0 %v386
        %388 = vperm.xlu0 %387, %v377
        %v389 = vpop.permute.xlu0 %388
        %v390 = vperm.slane %v324, 5
        %v391 = vlaneseq
        %v392 = vshrl.u32 %v391, 7
        %394 = vset.pattern.permute.xlu0 %v392
        %395 = vperm.xlu0 %394, %v390
        %v396 = vpop.permute.xlu0 %395
        %v397 = vlaneseq
        %v398 = vshrl.u32 %v397, 7
        %v399 = vadd.s32 %v398, 8
        %400 = vset.pattern.permute.xlu0 %v399
        %401 = vperm.xlu0 %400, %v390
        %v402 = vpop.permute.xlu0 %401
        %v403 = vperm.slane %v324, 6
        %v404 = vlaneseq
        %v405 = vshrl.u32 %v404, 7
        %407 = vset.pattern.permute.xlu0 %v405
        %408 = vperm.xlu0 %407, %v403
        %v409 = vpop.permute.xlu0 %408
        %v410 = vlaneseq
        %v411 = vshrl.u32 %v410, 7
        %v412 = vadd.s32 %v411, 8
        %413 = vset.pattern.permute.xlu0 %v412
        %414 = vperm.xlu0 %413, %v403
        %v415 = vpop.permute.xlu0 %414
        %v416 = vperm.slane %v324, 7
        %v417 = vlaneseq
        %v418 = vshrl.u32 %v417, 7
        %420 = vset.pattern.permute.xlu0 %v418
        %421 = vperm.xlu0 %420, %v416
        %v422 = vpop.permute.xlu0 %421
        %v423 = vlaneseq
        %v424 = vshrl.u32 %v423, 7
        %v425 = vadd.s32 %v424, 8
        %426 = vset.pattern.permute.xlu0 %v425
        %427 = vperm.xlu0 %426, %v416
        %v428 = vpop.permute.xlu0 %427
        %vm429 = vcmp.eq.s32.totalorder %v331, %v322
        %vm430 = vcmp.eq.s32.totalorder %v337, %v322
        %vm431 = vcmp.eq.s32.totalorder %v344, %v322
        %vm432 = vcmp.eq.s32.totalorder %v350, %v322
        %vm433 = vcmp.eq.s32.totalorder %v357, %v322
        %vm434 = vcmp.eq.s32.totalorder %v363, %v322
        %vm435 = vcmp.eq.s32.totalorder %v370, %v322
        %vm436 = vcmp.eq.s32.totalorder %v376, %v322
        %vm437 = vcmp.eq.s32.totalorder %v383, %v322
        %vm438 = vcmp.eq.s32.totalorder %v389, %v322
        %vm439 = vcmp.eq.s32.totalorder %v396, %v322
        %vm440 = vcmp.eq.s32.totalorder %v402, %v322
        %vm441 = vcmp.eq.s32.totalorder %v409, %v322
        %vm442 = vcmp.eq.s32.totalorder %v415, %v322
        %vm443 = vcmp.eq.s32.totalorder %v422, %v322
        %vm444 = vcmp.eq.s32.totalorder %v428, %v322
        %v445 = vsel %vm429, 1, 0
        %v446 = vsel %vm430, 1, 0
        %v447 = vsel %vm431, 1, 0
        %v448 = vsel %vm432, 1, 0
        %v449 = vsel %vm433, 1, 0
        %v450 = vsel %vm434, 1, 0
        %v451 = vsel %vm435, 1, 0
        %v452 = vsel %vm436, 1, 0
        %v453 = vsel %vm437, 1, 0
        %v454 = vsel %vm438, 1, 0
        %v455 = vsel %vm439, 1, 0
        %v456 = vsel %vm440, 1, 0
        %v457 = vsel %vm441, 1, 0
        %v458 = vsel %vm442, 1, 0
        %v459 = vsel %vm443, 1, 0
        %v460 = vsel %vm444, 1, 0
        %v461 = vcvt.s32.f32 %v445
        %v462 = vcvt.s32.f32 %v446
        %v463 = vcvt.s32.f32 %v447
        %v464 = vcvt.s32.f32 %v448
        %v465 = vcvt.s32.f32 %v449
        %v466 = vcvt.s32.f32 %v450
        %v467 = vcvt.s32.f32 %v451
        %v468 = vcvt.s32.f32 %v452
        %v469 = vcvt.s32.f32 %v453
        %v470 = vcvt.s32.f32 %v454
        %v471 = vcvt.s32.f32 %v455
        %v472 = vcvt.s32.f32 %v456
        %v473 = vcvt.s32.f32 %v457
        %v474 = vcvt.s32.f32 %v458
        %v475 = vcvt.s32.f32 %v459
        %v476 = vcvt.s32.f32 %v460
        %v477 = vpack.c.bf16 %v461, %v461
        %v478 = vpack.c.bf16 %v462, %v462
        %v479 = vpack.c.bf16 %v463, %v463
        %v480 = vpack.c.bf16 %v464, %v464
        %v481 = vpack.c.bf16 %v465, %v465
        %v482 = vpack.c.bf16 %v466, %v466
        %v483 = vpack.c.bf16 %v467, %v467
        %v484 = vpack.c.bf16 %v468, %v468
        %v485 = vpack.c.bf16 %v469, %v469
        %v486 = vpack.c.bf16 %v470, %v470
        %v487 = vpack.c.bf16 %v471, %v471
        %v488 = vpack.c.bf16 %v472, %v472
        %v489 = vpack.c.bf16 %v473, %v473
        %v490 = vpack.c.bf16 %v474, %v474
        %v491 = vpack.c.bf16 %v475, %v475
        %v492 = vpack.c.bf16 %v476, %v476
        %v493 = vld [vmem:[#allocation4] sm:$0xf]
        %v494 = vld [vmem:[#allocation4 + $0x4] sm:$0xf]
        %v495 = vld [vmem:[#allocation4 + $0x8] sm:$0xf]
        %v496 = vld [vmem:[#allocation4 + $0xc] sm:$0xf]
        %v497 = vld [vmem:[#allocation4 + $0x10] sm:$0xf]
        %v498 = vld [vmem:[#allocation4 + $0x14] sm:$0xf]
        %v499 = vld [vmem:[#allocation4 + $0x18] sm:$0xf]
        %v500 = vld [vmem:[#allocation4 + $0x1c] sm:$0xf]
        %v501 = vld [vmem:[#allocation4 + $0x20] sm:$0xf]
        %v502 = vld [vmem:[#allocation4 + $0x24] sm:$0xf]
        %v503 = vld [vmem:[#allocation4 + $0x28] sm:$0xf]
        %v504 = vld [vmem:[#allocation4 + $0x2c] sm:$0xf]
        %v505 = vld [vmem:[#allocation4 + $0x30] sm:$0xf]
        %v506 = vld [vmem:[#allocation4 + $0x34] sm:$0xf]
        %v507 = vld [vmem:[#allocation4 + $0x38] sm:$0xf]
        %v508 = vld [vmem:[#allocation4 + $0x3c] sm:$0xf]
        %v525 = vunpack.c.l.b16 %v477
        %v526 = vunpack.c.l.b16 %v478
        %v527 = vunpack.c.l.b16 %v479
        %v528 = vunpack.c.l.b16 %v480
        %v529 = vunpack.c.l.b16 %v481
        %v530 = vunpack.c.l.b16 %v482
        %v531 = vunpack.c.l.b16 %v483
        %v532 = vunpack.c.l.b16 %v484
        %v533 = vunpack.c.l.b16 %v485
        %v534 = vunpack.c.l.b16 %v486
        %v535 = vunpack.c.l.b16 %v487
        %v536 = vunpack.c.l.b16 %v488
        %v537 = vunpack.c.l.b16 %v489
        %v538 = vunpack.c.l.b16 %v490
        %v539 = vunpack.c.l.b16 %v491
        %v540 = vunpack.c.l.b16 %v492
        %v541 = vpack.c.b16 %v526, %v525
        %v542 = vpack.c.b16 %v528, %v527
        %v543 = vpack.c.b16 %v530, %v529
        %v544 = vpack.c.b16 %v532, %v531
        %v545 = vpack.c.b16 %v534, %v533
        %v546 = vpack.c.b16 %v536, %v535
        %v547 = vpack.c.b16 %v538, %v537
        %v548 = vpack.c.b16 %v540, %v539
        %v573 = vunpack.c.l.b16 %v493
        %v574 = vunpack.c.l.b16 %v494
        %v575 = vunpack.c.l.b16 %v495
        %v576 = vunpack.c.l.b16 %v496
        %v577 = vunpack.c.l.b16 %v497
        %v578 = vunpack.c.l.b16 %v498
        %v579 = vunpack.c.l.b16 %v499
        %v580 = vunpack.c.l.b16 %v500
        %v581 = vunpack.c.l.b16 %v501
        %v582 = vunpack.c.l.b16 %v502
        %v583 = vunpack.c.l.b16 %v503
        %v584 = vunpack.c.l.b16 %v504
        %v585 = vunpack.c.l.b16 %v505
        %v586 = vunpack.c.l.b16 %v506
        %v587 = vunpack.c.l.b16 %v507
        %v588 = vunpack.c.l.b16 %v508
        %v589 = vpack.c.b16 %v574, %v573
        %v590 = vpack.c.b16 %v576, %v575
        %v591 = vpack.c.b16 %v578, %v577
        %v592 = vpack.c.b16 %v580, %v579
        %v593 = vpack.c.b16 %v582, %v581
        %v594 = vpack.c.b16 %v584, %v583
        %v595 = vpack.c.b16 %v586, %v585
        %v596 = vpack.c.b16 %v588, %v587
        %605 = vmatpush.bf16.msra.mxu0 %v596
        %606 = vmatpush.bf16.msra.mxu0 %v595
        %607 = vmatpush.bf16.msra.mxu0 %v594
        %608 = vmatpush.bf16.msra.mxu0 %v593
        %609 = vmatpush.bf16.msra.mxu0 %v592
        %610 = vmatpush.bf16.msra.mxu0 %v591
        %611 = vmatpush.bf16.msra.mxu0 %v590
        %612 = vmatpush.bf16.msra.mxu0 %v589
        %613 = vmatmul.bf16.gmra.mxu0 %v541
        %v614 = vpop.f32.mrf.mxu0
        %v615 = vadd.f32 0.0, %v614
        %v616 = vpop.f32.mrf.mxu0
        %v617 = vadd.f32 0.0, %v616
        %618 = vmatmul.bf16.gmra.mxu0 %v542
        %v619 = vpop.f32.mrf.mxu0
        %v620 = vadd.f32 0.0, %v619
        %v621 = vpop.f32.mrf.mxu0
        %v622 = vadd.f32 0.0, %v621
        %623 = vmatmul.bf16.gmra.mxu0 %v543
        %v624 = vpop.f32.mrf.mxu0
        %v625 = vadd.f32 0.0, %v624
        %v626 = vpop.f32.mrf.mxu0
        %v627 = vadd.f32 0.0, %v626
        %628 = vmatmul.bf16.gmra.mxu0 %v544
        %v629 = vpop.f32.mrf.mxu0
        %v630 = vadd.f32 0.0, %v629
        %v631 = vpop.f32.mrf.mxu0
        %v632 = vadd.f32 0.0, %v631
        %633 = vmatmul.bf16.gmra.mxu0 %v545
        %v634 = vpop.f32.mrf.mxu0
        %v635 = vadd.f32 0.0, %v634
        %v636 = vpop.f32.mrf.mxu0
        %v637 = vadd.f32 0.0, %v636
        %638 = vmatmul.bf16.gmra.mxu0 %v546
        %v639 = vpop.f32.mrf.mxu0
        %v640 = vadd.f32 0.0, %v639
        %v641 = vpop.f32.mrf.mxu0
        %v642 = vadd.f32 0.0, %v641
        %643 = vmatmul.bf16.gmra.mxu0 %v547
        %v644 = vpop.f32.mrf.mxu0
        %v645 = vadd.f32 0.0, %v644
        %v646 = vpop.f32.mrf.mxu0
        %v647 = vadd.f32 0.0, %v646
        %648 = vmatmul.bf16.gmra.mxu0 %v548
        %v649 = vpop.f32.mrf.mxu0
        %v650 = vadd.f32 0.0, %v649
        %v651 = vpop.f32.mrf.mxu0
        %v652 = vadd.f32 0.0, %v651
        %653 = vdwg.mxu0
        %v655 = vperm.slane %v323, 0
        %v657 = vadd.f32 %v655, %v615
        %v658 = vadd.f32 %v655, %v617
        %v659 = vadd.f32 %v655, %v620
        %v660 = vadd.f32 %v655, %v622
        %v661 = vadd.f32 %v655, %v625
        %v662 = vadd.f32 %v655, %v627
        %v663 = vadd.f32 %v655, %v630
        %v664 = vadd.f32 %v655, %v632
        %v665 = vadd.f32 %v655, %v635
        %v666 = vadd.f32 %v655, %v637
        %v667 = vadd.f32 %v655, %v640
        %v668 = vadd.f32 %v655, %v642
        %v669 = vadd.f32 %v655, %v645
        %v670 = vadd.f32 %v655, %v647
        %v671 = vadd.f32 %v655, %v650
        %v672 = vadd.f32 %v655, %v652
        %s673 = scalar_lea.vmem %s273, 8 [#allocation2]
        %v674 = vld [vmem:[%s673] sm:$0xff]
        %v675 = vperm.slane %v674, 0
        %v676 = vlaneseq
        %v677 = vshrl.u32 %v676, 7
        %679 = vset.pattern.permute.xlu0 %v677
        %680 = vperm.xlu0 %679, %v675
        %v681 = vpop.permute.xlu0 %680
        %v682 = vlaneseq
        %v683 = vshrl.u32 %v682, 7
        %v684 = vadd.s32 %v683, 8
        %685 = vset.pattern.permute.xlu0 %v684
        %686 = vperm.xlu0 %685, %v675
        %v687 = vpop.permute.xlu0 %686
        %v688 = vperm.slane %v674, 1
        %v689 = vlaneseq
        %v690 = vshrl.u32 %v689, 7
        %692 = vset.pattern.permute.xlu0 %v690
        %693 = vperm.xlu0 %692, %v688
        %v694 = vpop.permute.xlu0 %693
        %v695 = vlaneseq
        %v696 = vshrl.u32 %v695, 7
        %v697 = vadd.s32 %v696, 8
        %698 = vset.pattern.permute.xlu0 %v697
        %699 = vperm.xlu0 %698, %v688
        %v700 = vpop.permute.xlu0 %699
        %v701 = vperm.slane %v674, 2
        %v702 = vlaneseq
        %v703 = vshrl.u32 %v702, 7
        %705 = vset.pattern.permute.xlu0 %v703
        %706 = vperm.xlu0 %705, %v701
        %v707 = vpop.permute.xlu0 %706
        %v708 = vlaneseq
        %v709 = vshrl.u32 %v708, 7
        %v710 = vadd.s32 %v709, 8
        %711 = vset.pattern.permute.xlu0 %v710
        %712 = vperm.xlu0 %711, %v701
        %v713 = vpop.permute.xlu0 %712
        %v714 = vperm.slane %v674, 3
        %v715 = vlaneseq
        %v716 = vshrl.u32 %v715, 7
        %718 = vset.pattern.permute.xlu0 %v716
        %719 = vperm.xlu0 %718, %v714
        %v720 = vpop.permute.xlu0 %719
        %v721 = vlaneseq
        %v722 = vshrl.u32 %v721, 7
        %v723 = vadd.s32 %v722, 8
        %724 = vset.pattern.permute.xlu0 %v723
        %725 = vperm.xlu0 %724, %v714
        %v726 = vpop.permute.xlu0 %725
        %v727 = vperm.slane %v674, 4
        %v728 = vlaneseq
        %v729 = vshrl.u32 %v728, 7
        %731 = vset.pattern.permute.xlu0 %v729
        %732 = vperm.xlu0 %731, %v727
        %v733 = vpop.permute.xlu0 %732
        %v734 = vlaneseq
        %v735 = vshrl.u32 %v734, 7
        %v736 = vadd.s32 %v735, 8
        %737 = vset.pattern.permute.xlu0 %v736
        %738 = vperm.xlu0 %737, %v727
        %v739 = vpop.permute.xlu0 %738
        %v740 = vperm.slane %v674, 5
        %v741 = vlaneseq
        %v742 = vshrl.u32 %v741, 7
        %744 = vset.pattern.permute.xlu0 %v742
        %745 = vperm.xlu0 %744, %v740
        %v746 = vpop.permute.xlu0 %745
        %v747 = vlaneseq
        %v748 = vshrl.u32 %v747, 7
        %v749 = vadd.s32 %v748, 8
        %750 = vset.pattern.permute.xlu0 %v749
        %751 = vperm.xlu0 %750, %v740
        %v752 = vpop.permute.xlu0 %751
        %v753 = vperm.slane %v674, 6
        %v754 = vlaneseq
        %v755 = vshrl.u32 %v754, 7
        %757 = vset.pattern.permute.xlu0 %v755
        %758 = vperm.xlu0 %757, %v753
        %v759 = vpop.permute.xlu0 %758
        %v760 = vlaneseq
        %v761 = vshrl.u32 %v760, 7
        %v762 = vadd.s32 %v761, 8
        %763 = vset.pattern.permute.xlu0 %v762
        %764 = vperm.xlu0 %763, %v753
        %v765 = vpop.permute.xlu0 %764
        %v766 = vperm.slane %v674, 7
        %v767 = vlaneseq
        %v768 = vshrl.u32 %v767, 7
        %770 = vset.pattern.permute.xlu0 %v768
        %771 = vperm.xlu0 %770, %v766
        %v772 = vpop.permute.xlu0 %771
        %v773 = vlaneseq
        %v774 = vshrl.u32 %v773, 7
        %v775 = vadd.s32 %v774, 8
        %776 = vset.pattern.permute.xlu0 %v775
        %777 = vperm.xlu0 %776, %v766
        %v778 = vpop.permute.xlu0 %777
        %vm779 = vcmp.eq.s32.totalorder %v681, %v322
        %vm780 = vcmp.eq.s32.totalorder %v687, %v322
        %vm781 = vcmp.eq.s32.totalorder %v694, %v322
        %vm782 = vcmp.eq.s32.totalorder %v700, %v322
        %vm783 = vcmp.eq.s32.totalorder %v707, %v322
        %vm784 = vcmp.eq.s32.totalorder %v713, %v322
        %vm785 = vcmp.eq.s32.totalorder %v720, %v322
        %vm786 = vcmp.eq.s32.totalorder %v726, %v322
        %vm787 = vcmp.eq.s32.totalorder %v733, %v322
        %vm788 = vcmp.eq.s32.totalorder %v739, %v322
        %vm789 = vcmp.eq.s32.totalorder %v746, %v322
        %vm790 = vcmp.eq.s32.totalorder %v752, %v322
        %vm791 = vcmp.eq.s32.totalorder %v759, %v322
        %vm792 = vcmp.eq.s32.totalorder %v765, %v322
        %vm793 = vcmp.eq.s32.totalorder %v772, %v322
        %vm794 = vcmp.eq.s32.totalorder %v778, %v322
        %v795 = vsel %vm779, 1, 0
        %v796 = vsel %vm780, 1, 0
        %v797 = vsel %vm781, 1, 0
        %v798 = vsel %vm782, 1, 0
        %v799 = vsel %vm783, 1, 0
        %v800 = vsel %vm784, 1, 0
        %v801 = vsel %vm785, 1, 0
        %v802 = vsel %vm786, 1, 0
        %v803 = vsel %vm787, 1, 0
        %v804 = vsel %vm788, 1, 0
        %v805 = vsel %vm789, 1, 0
        %v806 = vsel %vm790, 1, 0
        %v807 = vsel %vm791, 1, 0
        %v808 = vsel %vm792, 1, 0
        %v809 = vsel %vm793, 1, 0
        %v810 = vsel %vm794, 1, 0
        %v811 = vcvt.s32.f32 %v795
        %v812 = vcvt.s32.f32 %v796
        %v813 = vcvt.s32.f32 %v797
        %v814 = vcvt.s32.f32 %v798
        %v815 = vcvt.s32.f32 %v799
        %v816 = vcvt.s32.f32 %v800
        %v817 = vcvt.s32.f32 %v801
        %v818 = vcvt.s32.f32 %v802
        %v819 = vcvt.s32.f32 %v803
        %v820 = vcvt.s32.f32 %v804
        %v821 = vcvt.s32.f32 %v805
        %v822 = vcvt.s32.f32 %v806
        %v823 = vcvt.s32.f32 %v807
        %v824 = vcvt.s32.f32 %v808
        %v825 = vcvt.s32.f32 %v809
        %v826 = vcvt.s32.f32 %v810
        %v827 = vpack.c.bf16 %v811, %v811
        %v828 = vpack.c.bf16 %v812, %v812
        %v829 = vpack.c.bf16 %v813, %v813
        %v830 = vpack.c.bf16 %v814, %v814
        %v831 = vpack.c.bf16 %v815, %v815
        %v832 = vpack.c.bf16 %v816, %v816
        %v833 = vpack.c.bf16 %v817, %v817
        %v834 = vpack.c.bf16 %v818, %v818
        %v835 = vpack.c.bf16 %v819, %v819
        %v836 = vpack.c.bf16 %v820, %v820
        %v837 = vpack.c.bf16 %v821, %v821
        %v838 = vpack.c.bf16 %v822, %v822
        %v839 = vpack.c.bf16 %v823, %v823
        %v840 = vpack.c.bf16 %v824, %v824
        %v841 = vpack.c.bf16 %v825, %v825
        %v842 = vpack.c.bf16 %v826, %v826
        %s843 = scalar_lea.vmem [#allocation4], 64
        %v844 = vld [vmem:[%s843] sm:$0xf]
        %v845 = vld [vmem:[%s843 + $0x4] sm:$0xf]
        %v846 = vld [vmem:[%s843 + $0x8] sm:$0xf]
        %v847 = vld [vmem:[%s843 + $0xc] sm:$0xf]
        %v848 = vld [vmem:[%s843 + $0x10] sm:$0xf]
        %v849 = vld [vmem:[%s843 + $0x14] sm:$0xf]
        %v850 = vld [vmem:[%s843 + $0x18] sm:$0xf]
        %v851 = vld [vmem:[%s843 + $0x1c] sm:$0xf]
        %v852 = vld [vmem:[%s843 + $0x20] sm:$0xf]
        %v853 = vld [vmem:[%s843 + $0x24] sm:$0xf]
        %v854 = vld [vmem:[%s843 + $0x28] sm:$0xf]
        %v855 = vld [vmem:[%s843 + $0x2c] sm:$0xf]
        %v856 = vld [vmem:[%s843 + $0x30] sm:$0xf]
        %v857 = vld [vmem:[%s843 + $0x34] sm:$0xf]
        %v858 = vld [vmem:[%s843 + $0x38] sm:$0xf]
        %v859 = vld [vmem:[%s843 + $0x3c] sm:$0xf]
        %v876 = vunpack.c.l.b16 %v827
        %v877 = vunpack.c.l.b16 %v828
        %v878 = vunpack.c.l.b16 %v829
        %v879 = vunpack.c.l.b16 %v830
        %v880 = vunpack.c.l.b16 %v831
        %v881 = vunpack.c.l.b16 %v832
        %v882 = vunpack.c.l.b16 %v833
        %v883 = vunpack.c.l.b16 %v834
        %v884 = vunpack.c.l.b16 %v835
        %v885 = vunpack.c.l.b16 %v836
        %v886 = vunpack.c.l.b16 %v837
        %v887 = vunpack.c.l.b16 %v838
        %v888 = vunpack.c.l.b16 %v839
        %v889 = vunpack.c.l.b16 %v840
        %v890 = vunpack.c.l.b16 %v841
        %v891 = vunpack.c.l.b16 %v842
        %v892 = vpack.c.b16 %v877, %v876
        %v893 = vpack.c.b16 %v879, %v878
        %v894 = vpack.c.b16 %v881, %v880
        %v895 = vpack.c.b16 %v883, %v882
        %v896 = vpack.c.b16 %v885, %v884
        %v897 = vpack.c.b16 %v887, %v886
        %v898 = vpack.c.b16 %v889, %v888
        %v899 = vpack.c.b16 %v891, %v890
        %v924 = vunpack.c.l.b16 %v844
        %v925 = vunpack.c.l.b16 %v845
        %v926 = vunpack.c.l.b16 %v846
        %v927 = vunpack.c.l.b16 %v847
        %v928 = vunpack.c.l.b16 %v848
        %v929 = vunpack.c.l.b16 %v849
        %v930 = vunpack.c.l.b16 %v850
        %v931 = vunpack.c.l.b16 %v851
        %v932 = vunpack.c.l.b16 %v852
        %v933 = vunpack.c.l.b16 %v853
        %v934 = vunpack.c.l.b16 %v854
        %v935 = vunpack.c.l.b16 %v855
        %v936 = vunpack.c.l.b16 %v856
        %v937 = vunpack.c.l.b16 %v857
        %v938 = vunpack.c.l.b16 %v858
        %v939 = vunpack.c.l.b16 %v859
        %v940 = vpack.c.b16 %v925, %v924
        %v941 = vpack.c.b16 %v927, %v926
        %v942 = vpack.c.b16 %v929, %v928
        %v943 = vpack.c.b16 %v931, %v930
        %v944 = vpack.c.b16 %v933, %v932
        %v945 = vpack.c.b16 %v935, %v934
        %v946 = vpack.c.b16 %v937, %v936
        %v947 = vpack.c.b16 %v939, %v938
        %956 = vmatpush.bf16.msra.mxu0 %v947
        %957 = vmatpush.bf16.msra.mxu0 %v946
        %958 = vmatpush.bf16.msra.mxu0 %v945
        %959 = vmatpush.bf16.msra.mxu0 %v944
        %960 = vmatpush.bf16.msra.mxu0 %v943
        %961 = vmatpush.bf16.msra.mxu0 %v942
        %962 = vmatpush.bf16.msra.mxu0 %v941
        %963 = vmatpush.bf16.msra.mxu0 %v940
        %964 = vmatmul.bf16.gmra.mxu0 %v892
        %v965 = vpop.f32.mrf.mxu0
        %v966 = vadd.f32 0.0, %v965
        %v967 = vpop.f32.mrf.mxu0
        %v968 = vadd.f32 0.0, %v967
        %969 = vmatmul.bf16.gmra.mxu0 %v893
        %v970 = vpop.f32.mrf.mxu0
        %v971 = vadd.f32 0.0, %v970
        %v972 = vpop.f32.mrf.mxu0
        %v973 = vadd.f32 0.0, %v972
        %974 = vmatmul.bf16.gmra.mxu0 %v894
        %v975 = vpop.f32.mrf.mxu0
        %v976 = vadd.f32 0.0, %v975
        %v977 = vpop.f32.mrf.mxu0
        %v978 = vadd.f32 0.0, %v977
        %979 = vmatmul.bf16.gmra.mxu0 %v895
        %v980 = vpop.f32.mrf.mxu0
        %v981 = vadd.f32 0.0, %v980
        %v982 = vpop.f32.mrf.mxu0
        %v983 = vadd.f32 0.0, %v982
        %984 = vmatmul.bf16.gmra.mxu0 %v896
        %v985 = vpop.f32.mrf.mxu0
        %v986 = vadd.f32 0.0, %v985
        %v987 = vpop.f32.mrf.mxu0
        %v988 = vadd.f32 0.0, %v987
        %989 = vmatmul.bf16.gmra.mxu0 %v897
        %v990 = vpop.f32.mrf.mxu0
        %v991 = vadd.f32 0.0, %v990
        %v992 = vpop.f32.mrf.mxu0
        %v993 = vadd.f32 0.0, %v992
        %994 = vmatmul.bf16.gmra.mxu0 %v898
        %v995 = vpop.f32.mrf.mxu0
        %v996 = vadd.f32 0.0, %v995
        %v997 = vpop.f32.mrf.mxu0
        %v998 = vadd.f32 0.0, %v997
        %999 = vmatmul.bf16.gmra.mxu0 %v899
        %v1000 = vpop.f32.mrf.mxu0
        %v1001 = vadd.f32 0.0, %v1000
        %v1002 = vpop.f32.mrf.mxu0
        %v1003 = vadd.f32 0.0, %v1002
        %1004 = vdwg.mxu0
        %v1005 = vadd.f32 %v657, %v966
        %v1006 = vadd.f32 %v658, %v968
        %v1007 = vadd.f32 %v659, %v971
        %v1008 = vadd.f32 %v660, %v973
        %v1009 = vadd.f32 %v661, %v976
        %v1010 = vadd.f32 %v662, %v978
        %v1011 = vadd.f32 %v663, %v981
        %v1012 = vadd.f32 %v664, %v983
        %v1013 = vadd.f32 %v665, %v986
        %v1014 = vadd.f32 %v666, %v988
        %v1015 = vadd.f32 %v667, %v991
        %v1016 = vadd.f32 %v668, %v993
        %v1017 = vadd.f32 %v669, %v996
        %v1018 = vadd.f32 %v670, %v998
        %v1019 = vadd.f32 %v671, %v1001
        %v1020 = vadd.f32 %v672, %v1003
        %s1021 = scalar_lea.vmem %s273, 16 [#allocation2]
        %v1022 = vld [vmem:[%s1021] sm:$0xff]
        %v1023 = vperm.slane %v1022, 0
        %v1024 = vlaneseq
        %v1025 = vshrl.u32 %v1024, 7
        %1027 = vset.pattern.permute.xlu0 %v1025
        %1028 = vperm.xlu0 %1027, %v1023
        %v1029 = vpop.permute.xlu0 %1028
        %v1030 = vlaneseq
        %v1031 = vshrl.u32 %v1030, 7
        %v1032 = vadd.s32 %v1031, 8
        %1033 = vset.pattern.permute.xlu0 %v1032
        %1034 = vperm.xlu0 %1033, %v1023
        %v1035 = vpop.permute.xlu0 %1034
        %v1036 = vperm.slane %v1022, 1
        %v1037 = vlaneseq
        %v1038 = vshrl.u32 %v1037, 7
        %1040 = vset.pattern.permute.xlu0 %v1038
        %1041 = vperm.xlu0 %1040, %v1036
        %v1042 = vpop.permute.xlu0 %1041
        %v1043 = vlaneseq
        %v1044 = vshrl.u32 %v1043, 7
        %v1045 = vadd.s32 %v1044, 8
        %1046 = vset.pattern.permute.xlu0 %v1045
        %1047 = vperm.xlu0 %1046, %v1036
        %v1048 = vpop.permute.xlu0 %1047
        %v1049 = vperm.slane %v1022, 2
        %v1050 = vlaneseq
        %v1051 = vshrl.u32 %v1050, 7
        %1053 = vset.pattern.permute.xlu0 %v1051
        %1054 = vperm.xlu0 %1053, %v1049
        %v1055 = vpop.permute.xlu0 %1054
        %v1056 = vlaneseq
        %v1057 = vshrl.u32 %v1056, 7
        %v1058 = vadd.s32 %v1057, 8
        %1059 = vset.pattern.permute.xlu0 %v1058
        %1060 = vperm.xlu0 %1059, %v1049
        %v1061 = vpop.permute.xlu0 %1060
        %v1062 = vperm.slane %v1022, 3
        %v1063 = vlaneseq
        %v1064 = vshrl.u32 %v1063, 7
        %1066 = vset.pattern.permute.xlu0 %v1064
        %1067 = vperm.xlu0 %1066, %v1062
        %v1068 = vpop.permute.xlu0 %1067
        %v1069 = vlaneseq
        %v1070 = vshrl.u32 %v1069, 7
        %v1071 = vadd.s32 %v1070, 8
        %1072 = vset.pattern.permute.xlu0 %v1071
        %1073 = vperm.xlu0 %1072, %v1062
        %v1074 = vpop.permute.xlu0 %1073
        %v1075 = vperm.slane %v1022, 4
        %v1076 = vlaneseq
        %v1077 = vshrl.u32 %v1076, 7
        %1079 = vset.pattern.permute.xlu0 %v1077
        %1080 = vperm.xlu0 %1079, %v1075
        %v1081 = vpop.permute.xlu0 %1080
        %v1082 = vlaneseq
        %v1083 = vshrl.u32 %v1082, 7
        %v1084 = vadd.s32 %v1083, 8
        %1085 = vset.pattern.permute.xlu0 %v1084
        %1086 = vperm.xlu0 %1085, %v1075
        %v1087 = vpop.permute.xlu0 %1086
        %v1088 = vperm.slane %v1022, 5
        %v1089 = vlaneseq
        %v1090 = vshrl.u32 %v1089, 7
        %1092 = vset.pattern.permute.xlu0 %v1090
        %1093 = vperm.xlu0 %1092, %v1088
        %v1094 = vpop.permute.xlu0 %1093
        %v1095 = vlaneseq
        %v1096 = vshrl.u32 %v1095, 7
        %v1097 = vadd.s32 %v1096, 8
        %1098 = vset.pattern.permute.xlu0 %v1097
        %1099 = vperm.xlu0 %1098, %v1088
        %v1100 = vpop.permute.xlu0 %1099
        %v1101 = vperm.slane %v1022, 6
        %v1102 = vlaneseq
        %v1103 = vshrl.u32 %v1102, 7
        %1105 = vset.pattern.permute.xlu0 %v1103
        %1106 = vperm.xlu0 %1105, %v1101
        %v1107 = vpop.permute.xlu0 %1106
        %v1108 = vlaneseq
        %v1109 = vshrl.u32 %v1108, 7
        %v1110 = vadd.s32 %v1109, 8
        %1111 = vset.pattern.permute.xlu0 %v1110
        %1112 = vperm.xlu0 %1111, %v1101
        %v1113 = vpop.permute.xlu0 %1112
        %v1114 = vperm.slane %v1022, 7
        %v1115 = vlaneseq
        %v1116 = vshrl.u32 %v1115, 7
        %1118 = vset.pattern.permute.xlu0 %v1116
        %1119 = vperm.xlu0 %1118, %v1114
        %v1120 = vpop.permute.xlu0 %1119
        %v1121 = vlaneseq
        %v1122 = vshrl.u32 %v1121, 7
        %v1123 = vadd.s32 %v1122, 8
        %1124 = vset.pattern.permute.xlu0 %v1123
        %1125 = vperm.xlu0 %1124, %v1114
        %v1126 = vpop.permute.xlu0 %1125
        %vm1127 = vcmp.eq.s32.totalorder %v1029, %v322
        %vm1128 = vcmp.eq.s32.totalorder %v1035, %v322
        %vm1129 = vcmp.eq.s32.totalorder %v1042, %v322
        %vm1130 = vcmp.eq.s32.totalorder %v1048, %v322
        %vm1131 = vcmp.eq.s32.totalorder %v1055, %v322
        %vm1132 = vcmp.eq.s32.totalorder %v1061, %v322
        %vm1133 = vcmp.eq.s32.totalorder %v1068, %v322
        %vm1134 = vcmp.eq.s32.totalorder %v1074, %v322
        %vm1135 = vcmp.eq.s32.totalorder %v1081, %v322
        %vm1136 = vcmp.eq.s32.totalorder %v1087, %v322
        %vm1137 = vcmp.eq.s32.totalorder %v1094, %v322
        %vm1138 = vcmp.eq.s32.totalorder %v1100, %v322
        %vm1139 = vcmp.eq.s32.totalorder %v1107, %v322
        %vm1140 = vcmp.eq.s32.totalorder %v1113, %v322
        %vm1141 = vcmp.eq.s32.totalorder %v1120, %v322
        %vm1142 = vcmp.eq.s32.totalorder %v1126, %v322
        %v1143 = vsel %vm1127, 1, 0
        %v1144 = vsel %vm1128, 1, 0
        %v1145 = vsel %vm1129, 1, 0
        %v1146 = vsel %vm1130, 1, 0
        %v1147 = vsel %vm1131, 1, 0
        %v1148 = vsel %vm1132, 1, 0
        %v1149 = vsel %vm1133, 1, 0
        %v1150 = vsel %vm1134, 1, 0
        %v1151 = vsel %vm1135, 1, 0
        %v1152 = vsel %vm1136, 1, 0
        %v1153 = vsel %vm1137, 1, 0
        %v1154 = vsel %vm1138, 1, 0
        %v1155 = vsel %vm1139, 1, 0
        %v1156 = vsel %vm1140, 1, 0
        %v1157 = vsel %vm1141, 1, 0
        %v1158 = vsel %vm1142, 1, 0
        %v1159 = vcvt.s32.f32 %v1143
        %v1160 = vcvt.s32.f32 %v1144
        %v1161 = vcvt.s32.f32 %v1145
        %v1162 = vcvt.s32.f32 %v1146
        %v1163 = vcvt.s32.f32 %v1147
        %v1164 = vcvt.s32.f32 %v1148
        %v1165 = vcvt.s32.f32 %v1149
        %v1166 = vcvt.s32.f32 %v1150
        %v1167 = vcvt.s32.f32 %v1151
        %v1168 = vcvt.s32.f32 %v1152
        %v1169 = vcvt.s32.f32 %v1153
        %v1170 = vcvt.s32.f32 %v1154
        %v1171 = vcvt.s32.f32 %v1155
        %v1172 = vcvt.s32.f32 %v1156
        %v1173 = vcvt.s32.f32 %v1157
        %v1174 = vcvt.s32.f32 %v1158
        %v1175 = vpack.c.bf16 %v1159, %v1159
        %v1176 = vpack.c.bf16 %v1160, %v1160
        %v1177 = vpack.c.bf16 %v1161, %v1161
        %v1178 = vpack.c.bf16 %v1162, %v1162
        %v1179 = vpack.c.bf16 %v1163, %v1163
        %v1180 = vpack.c.bf16 %v1164, %v1164
        %v1181 = vpack.c.bf16 %v1165, %v1165
        %v1182 = vpack.c.bf16 %v1166, %v1166
        %v1183 = vpack.c.bf16 %v1167, %v1167
        %v1184 = vpack.c.bf16 %v1168, %v1168
        %v1185 = vpack.c.bf16 %v1169, %v1169
        %v1186 = vpack.c.bf16 %v1170, %v1170
        %v1187 = vpack.c.bf16 %v1171, %v1171
        %v1188 = vpack.c.bf16 %v1172, %v1172
        %v1189 = vpack.c.bf16 %v1173, %v1173
        %v1190 = vpack.c.bf16 %v1174, %v1174
        %s1191 = scalar_lea.vmem [#allocation4], 128
        %v1192 = vld [vmem:[%s1191] sm:$0xf]
        %v1193 = vld [vmem:[%s1191 + $0x4] sm:$0xf]
        %v1194 = vld [vmem:[%s1191 + $0x8] sm:$0xf]
        %v1195 = vld [vmem:[%s1191 + $0xc] sm:$0xf]
        %v1196 = vld [vmem:[%s1191 + $0x10] sm:$0xf]
        %v1197 = vld [vmem:[%s1191 + $0x14] sm:$0xf]
        %v1198 = vld [vmem:[%s1191 + $0x18] sm:$0xf]
        %v1199 = vld [vmem:[%s1191 + $0x1c] sm:$0xf]
        %v1200 = vld [vmem:[%s1191 + $0x20] sm:$0xf]
        %v1201 = vld [vmem:[%s1191 + $0x24] sm:$0xf]
        %v1202 = vld [vmem:[%s1191 + $0x28] sm:$0xf]
        %v1203 = vld [vmem:[%s1191 + $0x2c] sm:$0xf]
        %v1204 = vld [vmem:[%s1191 + $0x30] sm:$0xf]
        %v1205 = vld [vmem:[%s1191 + $0x34] sm:$0xf]
        %v1206 = vld [vmem:[%s1191 + $0x38] sm:$0xf]
        %v1207 = vld [vmem:[%s1191 + $0x3c] sm:$0xf]
        %v1224 = vunpack.c.l.b16 %v1175
        %v1225 = vunpack.c.l.b16 %v1176
        %v1226 = vunpack.c.l.b16 %v1177
        %v1227 = vunpack.c.l.b16 %v1178
        %v1228 = vunpack.c.l.b16 %v1179
        %v1229 = vunpack.c.l.b16 %v1180
        %v1230 = vunpack.c.l.b16 %v1181
        %v1231 = vunpack.c.l.b16 %v1182
        %v1232 = vunpack.c.l.b16 %v1183
        %v1233 = vunpack.c.l.b16 %v1184
        %v1234 = vunpack.c.l.b16 %v1185
        %v1235 = vunpack.c.l.b16 %v1186
        %v1236 = vunpack.c.l.b16 %v1187
        %v1237 = vunpack.c.l.b16 %v1188
        %v1238 = vunpack.c.l.b16 %v1189
        %v1239 = vunpack.c.l.b16 %v1190
        %v1240 = vpack.c.b16 %v1225, %v1224
        %v1241 = vpack.c.b16 %v1227, %v1226
        %v1242 = vpack.c.b16 %v1229, %v1228
        %v1243 = vpack.c.b16 %v1231, %v1230
        %v1244 = vpack.c.b16 %v1233, %v1232
        %v1245 = vpack.c.b16 %v1235, %v1234
        %v1246 = vpack.c.b16 %v1237, %v1236
        %v1247 = vpack.c.b16 %v1239, %v1238
        %v1272 = vunpack.c.l.b16 %v1192
        %v1273 = vunpack.c.l.b16 %v1193
        %v1274 = vunpack.c.l.b16 %v1194
        %v1275 = vunpack.c.l.b16 %v1195
        %v1276 = vunpack.c.l.b16 %v1196
        %v1277 = vunpack.c.l.b16 %v1197
        %v1278 = vunpack.c.l.b16 %v1198
        %v1279 = vunpack.c.l.b16 %v1199
        %v1280 = vunpack.c.l.b16 %v1200
        %v1281 = vunpack.c.l.b16 %v1201
        %v1282 = vunpack.c.l.b16 %v1202
        %v1283 = vunpack.c.l.b16 %v1203
        %v1284 = vunpack.c.l.b16 %v1204
        %v1285 = vunpack.c.l.b16 %v1205
        %v1286 = vunpack.c.l.b16 %v1206
        %v1287 = vunpack.c.l.b16 %v1207
        %v1288 = vpack.c.b16 %v1273, %v1272
        %v1289 = vpack.c.b16 %v1275, %v1274
        %v1290 = vpack.c.b16 %v1277, %v1276
        %v1291 = vpack.c.b16 %v1279, %v1278
        %v1292 = vpack.c.b16 %v1281, %v1280
        %v1293 = vpack.c.b16 %v1283, %v1282
        %v1294 = vpack.c.b16 %v1285, %v1284
        %v1295 = vpack.c.b16 %v1287, %v1286
        %1304 = vmatpush.bf16.msra.mxu0 %v1295
        %1305 = vmatpush.bf16.msra.mxu0 %v1294
        %1306 = vmatpush.bf16.msra.mxu0 %v1293
        %1307 = vmatpush.bf16.msra.mxu0 %v1292
        %1308 = vmatpush.bf16.msra.mxu0 %v1291
        %1309 = vmatpush.bf16.msra.mxu0 %v1290
        %1310 = vmatpush.bf16.msra.mxu0 %v1289
        %1311 = vmatpush.bf16.msra.mxu0 %v1288
        %1312 = vmatmul.bf16.gmra.mxu0 %v1240
        %v1313 = vpop.f32.mrf.mxu0
        %v1314 = vadd.f32 0.0, %v1313
        %v1315 = vpop.f32.mrf.mxu0
        %v1316 = vadd.f32 0.0, %v1315
        %1317 = vmatmul.bf16.gmra.mxu0 %v1241
        %v1318 = vpop.f32.mrf.mxu0
        %v1319 = vadd.f32 0.0, %v1318
        %v1320 = vpop.f32.mrf.mxu0
        %v1321 = vadd.f32 0.0, %v1320
        %1322 = vmatmul.bf16.gmra.mxu0 %v1242
        %v1323 = vpop.f32.mrf.mxu0
        %v1324 = vadd.f32 0.0, %v1323
        %v1325 = vpop.f32.mrf.mxu0
        %v1326 = vadd.f32 0.0, %v1325
        %1327 = vmatmul.bf16.gmra.mxu0 %v1243
        %v1328 = vpop.f32.mrf.mxu0
        %v1329 = vadd.f32 0.0, %v1328
        %v1330 = vpop.f32.mrf.mxu0
        %v1331 = vadd.f32 0.0, %v1330
        %1332 = vmatmul.bf16.gmra.mxu0 %v1244
        %v1333 = vpop.f32.mrf.mxu0
        %v1334 = vadd.f32 0.0, %v1333
        %v1335 = vpop.f32.mrf.mxu0
        %v1336 = vadd.f32 0.0, %v1335
        %1337 = vmatmul.bf16.gmra.mxu0 %v1245
        %v1338 = vpop.f32.mrf.mxu0
        %v1339 = vadd.f32 0.0, %v1338
        %v1340 = vpop.f32.mrf.mxu0
        %v1341 = vadd.f32 0.0, %v1340
        %1342 = vmatmul.bf16.gmra.mxu0 %v1246
        %v1343 = vpop.f32.mrf.mxu0
        %v1344 = vadd.f32 0.0, %v1343
        %v1345 = vpop.f32.mrf.mxu0
        %v1346 = vadd.f32 0.0, %v1345
        %1347 = vmatmul.bf16.gmra.mxu0 %v1247
        %v1348 = vpop.f32.mrf.mxu0
        %v1349 = vadd.f32 0.0, %v1348
        %v1350 = vpop.f32.mrf.mxu0
        %v1351 = vadd.f32 0.0, %v1350
        %1352 = vdwg.mxu0
        %v1353 = vadd.f32 %v1005, %v1314
        %v1354 = vadd.f32 %v1006, %v1316
        %v1355 = vadd.f32 %v1007, %v1319
        %v1356 = vadd.f32 %v1008, %v1321
        %v1357 = vadd.f32 %v1009, %v1324
        %v1358 = vadd.f32 %v1010, %v1326
        %v1359 = vadd.f32 %v1011, %v1329
        %v1360 = vadd.f32 %v1012, %v1331
        %v1361 = vadd.f32 %v1013, %v1334
        %v1362 = vadd.f32 %v1014, %v1336
        %v1363 = vadd.f32 %v1015, %v1339
        %v1364 = vadd.f32 %v1016, %v1341
        %v1365 = vadd.f32 %v1017, %v1344
        %v1366 = vadd.f32 %v1018, %v1346
        %v1367 = vadd.f32 %v1019, %v1349
        %v1368 = vadd.f32 %v1020, %v1351
        %s1369 = scalar_lea.vmem %s273, 24 [#allocation2]
        %v1370 = vld [vmem:[%s1369] sm:$0xff]
        %v1371 = vperm.slane %v1370, 0
        %v1372 = vlaneseq
        %v1373 = vshrl.u32 %v1372, 7
        %1375 = vset.pattern.permute.xlu0 %v1373
        %1376 = vperm.xlu0 %1375, %v1371
        %v1377 = vpop.permute.xlu0 %1376
        %v1378 = vlaneseq
        %v1379 = vshrl.u32 %v1378, 7
        %v1380 = vadd.s32 %v1379, 8
        %1381 = vset.pattern.permute.xlu0 %v1380
        %1382 = vperm.xlu0 %1381, %v1371
        %v1383 = vpop.permute.xlu0 %1382
        %v1384 = vperm.slane %v1370, 1
        %v1385 = vlaneseq
        %v1386 = vshrl.u32 %v1385, 7
        %1388 = vset.pattern.permute.xlu0 %v1386
        %1389 = vperm.xlu0 %1388, %v1384
        %v1390 = vpop.permute.xlu0 %1389
        %v1391 = vlaneseq
        %v1392 = vshrl.u32 %v1391, 7
        %v1393 = vadd.s32 %v1392, 8
        %1394 = vset.pattern.permute.xlu0 %v1393
        %1395 = vperm.xlu0 %1394, %v1384
        %v1396 = vpop.permute.xlu0 %1395
        %v1397 = vperm.slane %v1370, 2
        %v1398 = vlaneseq
        %v1399 = vshrl.u32 %v1398, 7
        %1401 = vset.pattern.permute.xlu0 %v1399
        %1402 = vperm.xlu0 %1401, %v1397
        %v1403 = vpop.permute.xlu0 %1402
        %v1404 = vlaneseq
        %v1405 = vshrl.u32 %v1404, 7
        %v1406 = vadd.s32 %v1405, 8
        %1407 = vset.pattern.permute.xlu0 %v1406
        %1408 = vperm.xlu0 %1407, %v1397
        %v1409 = vpop.permute.xlu0 %1408
        %v1410 = vperm.slane %v1370, 3
        %v1411 = vlaneseq
        %v1412 = vshrl.u32 %v1411, 7
        %1414 = vset.pattern.permute.xlu0 %v1412
        %1415 = vperm.xlu0 %1414, %v1410
        %v1416 = vpop.permute.xlu0 %1415
        %v1417 = vlaneseq
        %v1418 = vshrl.u32 %v1417, 7
        %v1419 = vadd.s32 %v1418, 8
        %1420 = vset.pattern.permute.xlu0 %v1419
        %1421 = vperm.xlu0 %1420, %v1410
        %v1422 = vpop.permute.xlu0 %1421
        %v1423 = vperm.slane %v1370, 4
        %v1424 = vlaneseq
        %v1425 = vshrl.u32 %v1424, 7
        %1427 = vset.pattern.permute.xlu0 %v1425
        %1428 = vperm.xlu0 %1427, %v1423
        %v1429 = vpop.permute.xlu0 %1428
        %v1430 = vlaneseq
        %v1431 = vshrl.u32 %v1430, 7
        %v1432 = vadd.s32 %v1431, 8
        %1433 = vset.pattern.permute.xlu0 %v1432
        %1434 = vperm.xlu0 %1433, %v1423
        %v1435 = vpop.permute.xlu0 %1434
        %v1436 = vperm.slane %v1370, 5
        %v1437 = vlaneseq
        %v1438 = vshrl.u32 %v1437, 7
        %1440 = vset.pattern.permute.xlu0 %v1438
        %1441 = vperm.xlu0 %1440, %v1436
        %v1442 = vpop.permute.xlu0 %1441
        %v1443 = vlaneseq
        %v1444 = vshrl.u32 %v1443, 7
        %v1445 = vadd.s32 %v1444, 8
        %1446 = vset.pattern.permute.xlu0 %v1445
        %1447 = vperm.xlu0 %1446, %v1436
        %v1448 = vpop.permute.xlu0 %1447
        %v1449 = vperm.slane %v1370, 6
        %v1450 = vlaneseq
        %v1451 = vshrl.u32 %v1450, 7
        %1453 = vset.pattern.permute.xlu0 %v1451
        %1454 = vperm.xlu0 %1453, %v1449
        %v1455 = vpop.permute.xlu0 %1454
        %v1456 = vlaneseq
        %v1457 = vshrl.u32 %v1456, 7
        %v1458 = vadd.s32 %v1457, 8
        %1459 = vset.pattern.permute.xlu0 %v1458
        %1460 = vperm.xlu0 %1459, %v1449
        %v1461 = vpop.permute.xlu0 %1460
        %v1462 = vperm.slane %v1370, 7
        %v1463 = vlaneseq
        %v1464 = vshrl.u32 %v1463, 7
        %1466 = vset.pattern.permute.xlu0 %v1464
        %1467 = vperm.xlu0 %1466, %v1462
        %v1468 = vpop.permute.xlu0 %1467
        %v1469 = vlaneseq
        %v1470 = vshrl.u32 %v1469, 7
        %v1471 = vadd.s32 %v1470, 8
        %1472 = vset.pattern.permute.xlu0 %v1471
        %1473 = vperm.xlu0 %1472, %v1462
        %v1474 = vpop.permute.xlu0 %1473
        %vm1475 = vcmp.eq.s32.totalorder %v1377, %v322
        %vm1476 = vcmp.eq.s32.totalorder %v1383, %v322
        %vm1477 = vcmp.eq.s32.totalorder %v1390, %v322
        %vm1478 = vcmp.eq.s32.totalorder %v1396, %v322
        %vm1479 = vcmp.eq.s32.totalorder %v1403, %v322
        %vm1480 = vcmp.eq.s32.totalorder %v1409, %v322
        %vm1481 = vcmp.eq.s32.totalorder %v1416, %v322
        %vm1482 = vcmp.eq.s32.totalorder %v1422, %v322
        %vm1483 = vcmp.eq.s32.totalorder %v1429, %v322
        %vm1484 = vcmp.eq.s32.totalorder %v1435, %v322
        %vm1485 = vcmp.eq.s32.totalorder %v1442, %v322
        %vm1486 = vcmp.eq.s32.totalorder %v1448, %v322
        %vm1487 = vcmp.eq.s32.totalorder %v1455, %v322
        %vm1488 = vcmp.eq.s32.totalorder %v1461, %v322
        %vm1489 = vcmp.eq.s32.totalorder %v1468, %v322
        %vm1490 = vcmp.eq.s32.totalorder %v1474, %v322
        %v1491 = vsel %vm1475, 1, 0
        %v1492 = vsel %vm1476, 1, 0
        %v1493 = vsel %vm1477, 1, 0
        %v1494 = vsel %vm1478, 1, 0
        %v1495 = vsel %vm1479, 1, 0
        %v1496 = vsel %vm1480, 1, 0
        %v1497 = vsel %vm1481, 1, 0
        %v1498 = vsel %vm1482, 1, 0
        %v1499 = vsel %vm1483, 1, 0
        %v1500 = vsel %vm1484, 1, 0
        %v1501 = vsel %vm1485, 1, 0
        %v1502 = vsel %vm1486, 1, 0
        %v1503 = vsel %vm1487, 1, 0
        %v1504 = vsel %vm1488, 1, 0
        %v1505 = vsel %vm1489, 1, 0
        %v1506 = vsel %vm1490, 1, 0
        %v1507 = vcvt.s32.f32 %v1491
        %v1508 = vcvt.s32.f32 %v1492
        %v1509 = vcvt.s32.f32 %v1493
        %v1510 = vcvt.s32.f32 %v1494
        %v1511 = vcvt.s32.f32 %v1495
        %v1512 = vcvt.s32.f32 %v1496
        %v1513 = vcvt.s32.f32 %v1497
        %v1514 = vcvt.s32.f32 %v1498
        %v1515 = vcvt.s32.f32 %v1499
        %v1516 = vcvt.s32.f32 %v1500
        %v1517 = vcvt.s32.f32 %v1501
        %v1518 = vcvt.s32.f32 %v1502
        %v1519 = vcvt.s32.f32 %v1503
        %v1520 = vcvt.s32.f32 %v1504
        %v1521 = vcvt.s32.f32 %v1505
        %v1522 = vcvt.s32.f32 %v1506
        %v1523 = vpack.c.bf16 %v1507, %v1507
        %v1524 = vpack.c.bf16 %v1508, %v1508
        %v1525 = vpack.c.bf16 %v1509, %v1509
        %v1526 = vpack.c.bf16 %v1510, %v1510
        %v1527 = vpack.c.bf16 %v1511, %v1511
        %v1528 = vpack.c.bf16 %v1512, %v1512
        %v1529 = vpack.c.bf16 %v1513, %v1513
        %v1530 = vpack.c.bf16 %v1514, %v1514
        %v1531 = vpack.c.bf16 %v1515, %v1515
        %v1532 = vpack.c.bf16 %v1516, %v1516
        %v1533 = vpack.c.bf16 %v1517, %v1517
        %v1534 = vpack.c.bf16 %v1518, %v1518
        %v1535 = vpack.c.bf16 %v1519, %v1519
        %v1536 = vpack.c.bf16 %v1520, %v1520
        %v1537 = vpack.c.bf16 %v1521, %v1521
        %v1538 = vpack.c.bf16 %v1522, %v1522
        %s1539 = scalar_lea.vmem [#allocation4], 192
        %v1540 = vld [vmem:[%s1539] sm:$0xf]
        %v1541 = vld [vmem:[%s1539 + $0x4] sm:$0xf]
        %v1542 = vld [vmem:[%s1539 + $0x8] sm:$0xf]
        %v1543 = vld [vmem:[%s1539 + $0xc] sm:$0xf]
        %v1544 = vld [vmem:[%s1539 + $0x10] sm:$0xf]
        %v1545 = vld [vmem:[%s1539 + $0x14] sm:$0xf]
        %v1546 = vld [vmem:[%s1539 + $0x18] sm:$0xf]
        %v1547 = vld [vmem:[%s1539 + $0x1c] sm:$0xf]
        %v1548 = vld [vmem:[%s1539 + $0x20] sm:$0xf]
        %v1549 = vld [vmem:[%s1539 + $0x24] sm:$0xf]
        %v1550 = vld [vmem:[%s1539 + $0x28] sm:$0xf]
        %v1551 = vld [vmem:[%s1539 + $0x2c] sm:$0xf]
        %v1552 = vld [vmem:[%s1539 + $0x30] sm:$0xf]
        %v1553 = vld [vmem:[%s1539 + $0x34] sm:$0xf]
        %v1554 = vld [vmem:[%s1539 + $0x38] sm:$0xf]
        %v1555 = vld [vmem:[%s1539 + $0x3c] sm:$0xf]
        %v1572 = vunpack.c.l.b16 %v1523
        %v1573 = vunpack.c.l.b16 %v1524
        %v1574 = vunpack.c.l.b16 %v1525
        %v1575 = vunpack.c.l.b16 %v1526
        %v1576 = vunpack.c.l.b16 %v1527
        %v1577 = vunpack.c.l.b16 %v1528
        %v1578 = vunpack.c.l.b16 %v1529
        %v1579 = vunpack.c.l.b16 %v1530
        %v1580 = vunpack.c.l.b16 %v1531
        %v1581 = vunpack.c.l.b16 %v1532
        %v1582 = vunpack.c.l.b16 %v1533
        %v1583 = vunpack.c.l.b16 %v1534
        %v1584 = vunpack.c.l.b16 %v1535
        %v1585 = vunpack.c.l.b16 %v1536
        %v1586 = vunpack.c.l.b16 %v1537
        %v1587 = vunpack.c.l.b16 %v1538
        %v1588 = vpack.c.b16 %v1573, %v1572
        %v1589 = vpack.c.b16 %v1575, %v1574
        %v1590 = vpack.c.b16 %v1577, %v1576
        %v1591 = vpack.c.b16 %v1579, %v1578
        %v1592 = vpack.c.b16 %v1581, %v1580
        %v1593 = vpack.c.b16 %v1583, %v1582
        %v1594 = vpack.c.b16 %v1585, %v1584
        %v1595 = vpack.c.b16 %v1587, %v1586
        %v1620 = vunpack.c.l.b16 %v1540
        %v1621 = vunpack.c.l.b16 %v1541
        %v1622 = vunpack.c.l.b16 %v1542
        %v1623 = vunpack.c.l.b16 %v1543
        %v1624 = vunpack.c.l.b16 %v1544
        %v1625 = vunpack.c.l.b16 %v1545
        %v1626 = vunpack.c.l.b16 %v1546
        %v1627 = vunpack.c.l.b16 %v1547
        %v1628 = vunpack.c.l.b16 %v1548
        %v1629 = vunpack.c.l.b16 %v1549
        %v1630 = vunpack.c.l.b16 %v1550
        %v1631 = vunpack.c.l.b16 %v1551
        %v1632 = vunpack.c.l.b16 %v1552
        %v1633 = vunpack.c.l.b16 %v1553
        %v1634 = vunpack.c.l.b16 %v1554
        %v1635 = vunpack.c.l.b16 %v1555
        %v1636 = vpack.c.b16 %v1621, %v1620
        %v1637 = vpack.c.b16 %v1623, %v1622
        %v1638 = vpack.c.b16 %v1625, %v1624
        %v1639 = vpack.c.b16 %v1627, %v1626
        %v1640 = vpack.c.b16 %v1629, %v1628
        %v1641 = vpack.c.b16 %v1631, %v1630
        %v1642 = vpack.c.b16 %v1633, %v1632
        %v1643 = vpack.c.b16 %v1635, %v1634
        %1652 = vmatpush.bf16.msra.mxu0 %v1643
        %1653 = vmatpush.bf16.msra.mxu0 %v1642
        %1654 = vmatpush.bf16.msra.mxu0 %v1641
        %1655 = vmatpush.bf16.msra.mxu0 %v1640
        %1656 = vmatpush.bf16.msra.mxu0 %v1639
        %1657 = vmatpush.bf16.msra.mxu0 %v1638
        %1658 = vmatpush.bf16.msra.mxu0 %v1637
        %1659 = vmatpush.bf16.msra.mxu0 %v1636
        %1660 = vmatmul.bf16.gmra.mxu0 %v1588
        %v1661 = vpop.f32.mrf.mxu0
        %v1662 = vadd.f32 0.0, %v1661
        %v1663 = vpop.f32.mrf.mxu0
        %v1664 = vadd.f32 0.0, %v1663
        %1665 = vmatmul.bf16.gmra.mxu0 %v1589
        %v1666 = vpop.f32.mrf.mxu0
        %v1667 = vadd.f32 0.0, %v1666
        %v1668 = vpop.f32.mrf.mxu0
        %v1669 = vadd.f32 0.0, %v1668
        %1670 = vmatmul.bf16.gmra.mxu0 %v1590
        %v1671 = vpop.f32.mrf.mxu0
        %v1672 = vadd.f32 0.0, %v1671
        %v1673 = vpop.f32.mrf.mxu0
        %v1674 = vadd.f32 0.0, %v1673
        %1675 = vmatmul.bf16.gmra.mxu0 %v1591
        %v1676 = vpop.f32.mrf.mxu0
        %v1677 = vadd.f32 0.0, %v1676
        %v1678 = vpop.f32.mrf.mxu0
        %v1679 = vadd.f32 0.0, %v1678
        %1680 = vmatmul.bf16.gmra.mxu0 %v1592
        %v1681 = vpop.f32.mrf.mxu0
        %v1682 = vadd.f32 0.0, %v1681
        %v1683 = vpop.f32.mrf.mxu0
        %v1684 = vadd.f32 0.0, %v1683
        %1685 = vmatmul.bf16.gmra.mxu0 %v1593
        %v1686 = vpop.f32.mrf.mxu0
        %v1687 = vadd.f32 0.0, %v1686
        %v1688 = vpop.f32.mrf.mxu0
        %v1689 = vadd.f32 0.0, %v1688
        %1690 = vmatmul.bf16.gmra.mxu0 %v1594
        %v1691 = vpop.f32.mrf.mxu0
        %v1692 = vadd.f32 0.0, %v1691
        %v1693 = vpop.f32.mrf.mxu0
        %v1694 = vadd.f32 0.0, %v1693
        %1695 = vmatmul.bf16.gmra.mxu0 %v1595
        %v1696 = vpop.f32.mrf.mxu0
        %v1697 = vadd.f32 0.0, %v1696
        %v1698 = vpop.f32.mrf.mxu0
        %v1699 = vadd.f32 0.0, %v1698
        %1700 = vdwg.mxu0
        %v1701 = vadd.f32 %v1353, %v1662
        %v1702 = vadd.f32 %v1354, %v1664
        %v1703 = vadd.f32 %v1355, %v1667
        %v1704 = vadd.f32 %v1356, %v1669
        %v1705 = vadd.f32 %v1357, %v1672
        %v1706 = vadd.f32 %v1358, %v1674
        %v1707 = vadd.f32 %v1359, %v1677
        %v1708 = vadd.f32 %v1360, %v1679
        %v1709 = vadd.f32 %v1361, %v1682
        %v1710 = vadd.f32 %v1362, %v1684
        %v1711 = vadd.f32 %v1363, %v1687
        %v1712 = vadd.f32 %v1364, %v1689
        %v1713 = vadd.f32 %v1365, %v1692
        %v1714 = vadd.f32 %v1366, %v1694
        %v1715 = vadd.f32 %v1367, %v1697
        %v1716 = vadd.f32 %v1368, %v1699
        %v1717 = vmax.f32 %v1701, 0.0
        %v1718 = vmax.f32 %v1702, 0.0
        %v1719 = vmax.f32 %v1703, 0.0
        %v1720 = vmax.f32 %v1704, 0.0
        %v1721 = vmax.f32 %v1705, 0.0
        %v1722 = vmax.f32 %v1706, 0.0
        %v1723 = vmax.f32 %v1707, 0.0
        %v1724 = vmax.f32 %v1708, 0.0
        %v1725 = vmax.f32 %v1709, 0.0
        %v1726 = vmax.f32 %v1710, 0.0
        %v1727 = vmax.f32 %v1711, 0.0
        %v1728 = vmax.f32 %v1712, 0.0
        %v1729 = vmax.f32 %v1713, 0.0
        %v1730 = vmax.f32 %v1714, 0.0
        %v1731 = vmax.f32 %v1715, 0.0
        %v1732 = vmax.f32 %v1716, 0.0
        %v1733 = vld [vmem:[#allocation6] sm:$0xff]
        %v1734 = vld [vmem:[#allocation6 + $0x8] sm:$0xff]
        %v1735 = vmul.f32 %v1717, %v1733
        %v1736 = vmul.f32 %v1718, %v1734
        %v1737 = vmul.f32 %v1719, %v1733
        %v1738 = vmul.f32 %v1720, %v1734
        %v1739 = vmul.f32 %v1721, %v1733
        %v1740 = vmul.f32 %v1722, %v1734
        %v1741 = vmul.f32 %v1723, %v1733
        %v1742 = vmul.f32 %v1724, %v1734
        %v1743 = vmul.f32 %v1725, %v1733
        %v1744 = vmul.f32 %v1726, %v1734
        %v1745 = vmul.f32 %v1727, %v1733
        %v1746 = vmul.f32 %v1728, %v1734
        %v1747 = vmul.f32 %v1729, %v1733
        %v1748 = vmul.f32 %v1730, %v1734
        %v1749 = vmul.f32 %v1731, %v1733
        %v1750 = vmul.f32 %v1732, %v1734
        %v1751 = vmax.f32 %v1735, %v1736
        %v1752 = vrot.slane %v1751, 4
        %v1753 = vmax.f32 %v1751, %v1752
        %v1754 = vrot.slane %v1753, 2
        %v1755 = vmax.f32 %v1753, %v1754
        %v1756 = vrot.slane %v1755, 1
        %v1757 = vmax.f32 %v1755, %v1756
        %v1758 = vmax.f32 %v1737, %v1738
        %v1759 = vrot.slane %v1758, 4
        %v1760 = vmax.f32 %v1758, %v1759
        %v1761 = vrot.slane %v1760, 2
        %v1762 = vmax.f32 %v1760, %v1761
        %v1763 = vrot.slane %v1762, 1
        %v1764 = vmax.f32 %v1762, %v1763
        %v1765 = vmax.f32 %v1739, %v1740
        %v1766 = vrot.slane %v1765, 4
        %v1767 = vmax.f32 %v1765, %v1766
        %v1768 = vrot.slane %v1767, 2
        %v1769 = vmax.f32 %v1767, %v1768
        %v1770 = vrot.slane %v1769, 1
        %v1771 = vmax.f32 %v1769, %v1770
        %v1772 = vmax.f32 %v1741, %v1742
        %v1773 = vrot.slane %v1772, 4
        %v1774 = vmax.f32 %v1772, %v1773
        %v1775 = vrot.slane %v1774, 2
        %v1776 = vmax.f32 %v1774, %v1775
        %v1777 = vrot.slane %v1776, 1
        %v1778 = vmax.f32 %v1776, %v1777
        %v1779 = vmax.f32 %v1743, %v1744
        %v1780 = vrot.slane %v1779, 4
        %v1781 = vmax.f32 %v1779, %v1780
        %v1782 = vrot.slane %v1781, 2
        %v1783 = vmax.f32 %v1781, %v1782
        %v1784 = vrot.slane %v1783, 1
        %v1785 = vmax.f32 %v1783, %v1784
        %v1786 = vmax.f32 %v1745, %v1746
        %v1787 = vrot.slane %v1786, 4
        %v1788 = vmax.f32 %v1786, %v1787
        %v1789 = vrot.slane %v1788, 2
        %v1790 = vmax.f32 %v1788, %v1789
        %v1791 = vrot.slane %v1790, 1
        %v1792 = vmax.f32 %v1790, %v1791
        %v1793 = vmax.f32 %v1747, %v1748
        %v1794 = vrot.slane %v1793, 4
        %v1795 = vmax.f32 %v1793, %v1794
        %v1796 = vrot.slane %v1795, 2
        %v1797 = vmax.f32 %v1795, %v1796
        %v1798 = vrot.slane %v1797, 1
        %v1799 = vmax.f32 %v1797, %v1798
        %v1800 = vmax.f32 %v1749, %v1750
        %v1801 = vrot.slane %v1800, 4
        %v1802 = vmax.f32 %v1800, %v1801
        %v1803 = vrot.slane %v1802, 2
        %v1804 = vmax.f32 %v1802, %v1803
        %v1805 = vrot.slane %v1804, 1
        %v1806 = vmax.f32 %v1804, %v1805
        %v1807 = vld [vmem:[#allocation7] sm:$0xff]
        %v1808 = vld [vmem:[#allocation7 + $0x8] sm:$0xff]
        %v1809 = vld [vmem:[#allocation7 + $0x10] sm:$0xff]
        %v1810 = vld [vmem:[#allocation7 + $0x18] sm:$0xff]
        %v1811 = vld [vmem:[#allocation7 + $0x20] sm:$0xff]
        %v1812 = vld [vmem:[#allocation7 + $0x28] sm:$0xff]
        %v1813 = vld [vmem:[#allocation7 + $0x30] sm:$0xff]
        %v1814 = vld [vmem:[#allocation7 + $0x38] sm:$0xff]
        %v1815 = vld [vmem:[#allocation7 + $0x40] sm:$0xff]
        %v1816 = vld [vmem:[#allocation7 + $0x48] sm:$0xff]
        %v1817 = vld [vmem:[#allocation7 + $0x50] sm:$0xff]
        %v1818 = vld [vmem:[#allocation7 + $0x58] sm:$0xff]
        %v1819 = vld [vmem:[#allocation7 + $0x60] sm:$0xff]
        %v1820 = vld [vmem:[#allocation7 + $0x68] sm:$0xff]
        %v1821 = vld [vmem:[#allocation7 + $0x70] sm:$0xff]
        %v1822 = vld [vmem:[#allocation7 + $0x78] sm:$0xff]
        %v1823 = vld [vmem:[%s5] sm:$0x1]
        %v1825 = vperm.slane %v1823, 0
        %vm1835 = vcmask 1041409
        %v1836 = vsel %vm1835, %v1764, %v1757
        %vm1837 = vcmask 1042434
        %v1838 = vsel %vm1837, %v1771, %v1836
        %vm1839 = vcmask 1043459
        %v1840 = vsel %vm1839, %v1778, %v1838
        %vm1841 = vcmask 1044484
        %v1842 = vsel %vm1841, %v1785, %v1840
        %vm1843 = vcmask 1045509
        %v1844 = vsel %vm1843, %v1792, %v1842
        %vm1845 = vcmask 1046534
        %v1846 = vsel %vm1845, %v1799, %v1844
        %vm1847 = vcmask 1047559
        %v1848 = vsel %vm1847, %v1806, %v1846
        %1850 = vmatpush.msra.mxu0 %v1822
        %1851 = vmatpush.msra.mxu0 %v1821
        %1852 = vmatpush.msra.mxu0 %v1820
        %1853 = vmatpush.msra.mxu0 %v1819
        %1854 = vmatpush.msra.mxu0 %v1818
        %1855 = vmatpush.msra.mxu0 %v1817
        %1856 = vmatpush.msra.mxu0 %v1816
        %1857 = vmatpush.msra.mxu0 %v1815
        %1858 = vmatpush.msra.mxu0 %v1814
        %1859 = vmatpush.msra.mxu0 %v1813
        %1860 = vmatpush.msra.mxu0 %v1812
        %1861 = vmatpush.msra.mxu0 %v1811
        %1862 = vmatpush.msra.mxu0 %v1810
        %1863 = vmatpush.msra.mxu0 %v1809
        %1864 = vmatpush.msra.mxu0 %v1808
        %1865 = vmatpush.msra.mxu0 %v1807
        %1866 = vmatmul.f32.gmra.mxu0 %v1848
        %v1867 = vpop.f32.mrf.mxu0
        %v1868 = vadd.f32 %v1825, %v1867
        %1869 = vdwg.mxu0
        %vm1870 = vcmask 64512
        %1871 = vst.msk [vmem:[%s320] sm:$0xff] %vm1870, %v1868
        %p1872 = scmp.lt.s32.totalorder %s22, 1
        %s1873 = scalar_select %p1872, %s22, 1
        %s1874 = smul.addr %s1873, 8
        %s1875 = scalar_lea.vmem %s6, %s1874
        // Predicated region
        $region61: #{tpu_custom_call.1} parent=43 // pred_check
          %p1876 = pneg %p171
        $region62: #{tpu_custom_call.1} parent=43 // pred_check_branch
          %1878 = sbr.rel (%p1876) target = $region64
        $region63: #{tpu_custom_call.1} parent=43 // pred_region
          _
        $region64: #{tpu_custom_call.1} parent=43 // pred_fallthru
          _
      $region44: #{tpu_custom_call.1} parent=5 // pred_fallthru
        _
      %p1879 = scmp.le.s32.totalorder 2, %s17
      // Predicated region
      $region65: #{tpu_custom_call.1} parent=5 // pred_check
        %p1880 = pneg %p1879
      $region66: #{tpu_custom_call.1} parent=5 // pred_check_branch
        %1882 = sbr.rel (%p1880) target = $region68
      $region67: #{tpu_custom_call.1} parent=5 // pred_region
        %s1883 = ssub.s32 %s17, 2
        // Predicated region
        $region69: #{tpu_custom_call.1} parent=67 // pred_check
          %p1884 = pneg %p177
        $region70: #{tpu_custom_call.1} parent=67 // pred_check_branch
          %1886 = sbr.rel (%p1884) target = $region72
        $region71: #{tpu_custom_call.1} parent=67 // pred_region
          %p1887 = scmp.lt.s32.totalorder %s23, 1
          %s1888 = scalar_select %p1887, %s23, 1
          %s1889 = smul.addr %s1888, 8
          %s1890 = scalar_lea.vmem %s6, %s1889
        $region72: #{tpu_custom_call.1} parent=67 // pred_fallthru
          _
      $region68: #{tpu_custom_call.1} parent=5 // pred_fallthru
        _
    $region6: #{tpu_custom_call.1} parent=1 // loop_footer
      %s21 = sadd.s32 1, %s17
    $region7: #{tpu_custom_call.1} parent=1 // loop_footer_branch
      %16 = sbr.rel target = $region3
    $region8: #{tpu_custom_call.1} parent=1 // loop_exit
      _
    %1891 = vsyncpa [#allocation3], 1
    %s1892 = scalar_lea.sflag [#allocation3], 1
    %1893 = vsyncpa %s1892, 1
    %1894 = vsyncpa [#allocation5], 1
    %1895 = vsyncpa [#allocation8], 1

</llo_original>
